<compile_context>
chip_gen: v5e
topology: v5e:2x2
jax: 0.10.0
libtpu: 0.0.40
codegen_flags: <defaults>
</compile_context>

<pallas_src>
import functools

import jax
import jax.numpy as jnp
from jax.experimental import pallas as pl
from jax.experimental.pallas import tpu as pltpu


def _make_kernel(B, T, H, O, L):
    """Fused (linear1+layer0-proj) -> stacked LSTM -> linear2 -> sigmoid kernel."""
    G = 4 * H                       # gate width = 128 = one full lane group
    assert G == 128, "kernel assumes 4*hidden == 128 (one vreg lane group)"

    def kernel(*refs):
        x_ref, gw0_ref, gb0_ref = refs[0], refs[1], refs[2]   # (T*B,Fp) bf16; (Fp,G) bf16; (1,G) f32
        w_hh_refs = refs[3:3 + L]                             # (G,G) bf16, zero rows outside [3H:4H]
        rest = refs[3 + L:]
        w_ih_refs = [rest[2 * i] for i in range(L - 1)]       # (G,G) bf16, zero rows outside [3H:4H]
        b_refs = [rest[2 * i + 1] for i in range(L - 1)]      # (1,G) f32 (b_ih + b_hh, reordered)
        w2_ref = rest[2 * (L - 1)]                            # (G,O) bf16, zero rows outside [3H:4H]
        b2_ref = rest[2 * (L - 1) + 1]                        # (1,O) f32
        out_ref = rest[2 * (L - 1) + 2]                       # (T*B,O) f32
        gates_buf = rest[2 * (L - 1) + 3]                     # (T*B,G) f32 scratch
        h_seq = rest[2 * (L - 1) + 4]                         # (T*B,G) f32 scratch

        # ---- layer-0 input gates (linear1 folded in): one MXU matmul ----
        gates_buf[...] = jnp.dot(
            x_ref[...], gw0_ref[...],
            preferred_element_type=jnp.float32) + gb0_ref[...]

        # Gate lane windows after host-side reorder: [ i | g | o | f ].
        # h / c are full 128-lane vregs; valid data sits in window 3 (lanes
        # [3H:4H]); other windows hold bounded garbage (products of sigmoid /
        # tanh outputs), killed by the zero rows of the padded weights.
        for layer in range(L):
            w_hh = w_hh_refs[layer][...]                      # loaded once per layer

            h_vec = jnp.zeros((B, G), jnp.float32)
            c_vec = jnp.zeros((B, G), jnp.float32)
            for t in range(T):         # T static & small: fully unrolled, h/c in vregs
                row = pl.ds(t * B, B)
                gates = gates_buf[row, :] + jnp.dot(
                    h_vec.astype(jnp.bfloat16), w_hh,
                    preferred_element_type=jnp.float32)       # (B, G)
                sig = jax.nn.sigmoid(gates)                   # i@W0   .@W1  o@W2  f@W3
                tnh = jnp.tanh(gates)                         #        g@W1
                r1 = pltpu.roll(sig, H, axis=1)               # f@W0   i@W1  .@W2  o@W3
                ig = r1 * tnh                                 # i*g valid @ W1
                fc = sig * c_vec                              # f*c valid @ W3
                c_vec = pltpu.roll(ig, 2 * H, axis=1) + fc    # i*g + f*c  @ W3
                h_vec = r1 * jnp.tanh(c_vec)                  # o*tanh(c)  @ W3
                h_seq[row, :] = h_vec                         # full-width lane-dense store

            # Next layer's input gates: one batched MXU matmul over all steps.
            if layer + 1 < L:
                gates_buf[...] = jnp.dot(
                    h_seq[...].astype(jnp.bfloat16), w_ih_refs[layer][...],
                    preferred_element_type=jnp.float32) + b_refs[layer][...]

        # ---- linear2 + sigmoid   (dropout2 == identity in eval mode) ----
        logits = jnp.dot(h_seq[...].astype(jnp.bfloat16), w2_ref[...],
                         preferred_element_type=jnp.float32) + b2_ref[...]
        out_ref[...] = jax.nn.sigmoid(logits)

    return kernel


def prepare_params(params, *, num_layers, hidden, num_features, out_dims):
    """One-time host-side constant prep (NOT on the per-call path):
    fold linear1 into the layer-0 LSTM input projection (eval-mode dropout is
    identity), reorder gate columns [i,f,g,o] -> [i,g,o,f], zero-pad weight
    rows into lane window 3, and pre-cast all MXU operands to bf16."""
    H, L, F, O = hidden, num_layers, num_features, out_dims
    G = 4 * H
    assert G == 128, "prep assumes 4*hidden == 128"
    F_pad = ((F + 127) // 128) * 128

    perm = (0, 2, 3, 1)  # [i, f, g, o] -> [i, g, o, f]

    def reorder(w):
        return jnp.concatenate([w[..., p * H:(p + 1) * H] for p in perm], axis=-1)

    def pad_rows_to_window3(w):   # (H, N) -> (G, N), real rows at [3H:4H]
        return jnp.concatenate([jnp.zeros((G - H, w.shape[-1]), w.dtype), w], axis=0)

    # Fold linear1: x @ w1 @ w_ih0 == x @ (w1 @ w_ih0); biases fold likewise.
    W0 = reorder(params["w1"] @ params["w_ih0"])                        # (F, G)
    b0 = reorder(params["b1"] @ params["w_ih0"] + params["b_l0"])       # (1, G)
    # Zero rows at the bottom to match the zero-padded columns of x.
    W0 = jnp.concatenate([W0, jnp.zeros((F_pad - F, G), W0.dtype)], axis=0)

    flat = [W0.astype(jnp.bfloat16), b0]
    for l in range(L):
        flat.append(pad_rows_to_window3(reorder(params[f"w_hh{l}"])).astype(jnp.bfloat16))
    for l in range(1, L):
        flat.append(pad_rows_to_window3(reorder(params[f"w_ih{l}"])).astype(jnp.bfloat16))
        flat.append(reorder(params[f"b_l{l}"]))
    flat.append(pad_rows_to_window3(params["w2"]).astype(jnp.bfloat16))
    flat.append(params["b2"])
    return tuple(jax.device_put(a) for a in flat)


@functools.partial(jax.jit,
                   static_argnames=("num_layers", "hidden", "out_dims", "num_features"))
def causal_temporal_lstm_forward(x, prepped, *, num_layers, hidden, out_dims, num_features):
    B, T, F = x.shape
    H, O, L = hidden, out_dims, num_layers
    G = 4 * H
    F_pad = ((num_features + 127) // 128) * 128

    # Layout plumbing stays in the (jitted) wrapper: the kernel sees a
    # contiguous, lane-dense, time-major bf16 slab.
    x_tm = jnp.transpose(x, (1, 0, 2)).reshape(T * B, F)
    if F_pad > F:
        x_tm = jnp.pad(x_tm, ((0, 0), (0, F_pad - F)))
    x_tm = x_tm.astype(jnp.bfloat16)

    flops = (2 * T * B * F_pad * G            # layer-0 input projection
             + L * T * 2 * B * G * G          # recurrent matmuls
             + (L - 1) * 2 * T * B * G * G    # inter-layer projections
             + 2 * T * B * G * O)             # output linear
    transcendentals = L * T * 3 * B * G + T * B * O
    bytes_accessed = (T * B * F_pad * 2
                      + sum(int(a.size) * a.dtype.itemsize for a in prepped)
                      + T * B * O * 4)

    out2d = pl.pallas_call(
        _make_kernel(B, T, H, O, L),
        out_shape=jax.ShapeDtypeStruct((T * B, O), jnp.float32),
        in_specs=[pl.BlockSpec(memory_space=pltpu.MemorySpace.VMEM)] * (1 + len(prepped)),
        out_specs=pl.BlockSpec(memory_space=pltpu.MemorySpace.VMEM),
        scratch_shapes=[
            pltpu.VMEM((T * B, G), jnp.float32),   # precomputed input-gate sequence
            pltpu.VMEM((T * B, G), jnp.float32),   # hidden-state sequence (window 3 valid)
        ],
        cost_estimate=pl.CostEstimate(flops=int(flops),
                                      transcendentals=int(transcendentals),
                                      bytes_accessed=int(bytes_accessed)),
    )(x_tm, *prepped)

    out = jnp.transpose(out2d.reshape(T, B, O), (1, 0, 2))   # back to (B, T, O)
    # torch .squeeze() parity: no size-1 dims at these shapes (footgun if B==1/T==1).
    return jnp.squeeze(out)


def _init_params(key, F, I, H, O, L):
    """Deterministic uniform(-1/sqrt(fan), 1/sqrt(fan)) init, PyTorch-style shapes,
    stored pre-transposed as (in, out) for row-major matmuls; gate order [i,f,g,o]."""
    params = {}

    def uni(k, shape, bound):
        return jax.random.uniform(k, shape, jnp.float32, -bound, bound)

    keys = jax.random.split(key, 4 + 4 * L)
    params["w1"] = uni(keys[0], (F, I), 1.0 / jnp.sqrt(F))
    params["b1"] = uni(keys[1], (1, I), 1.0 / jnp.sqrt(F))
    params["w2"] = uni(keys[2], (H, O), 1.0 / jnp.sqrt(H))
    params["b2"] = uni(keys[3], (1, O), 1.0 / jnp.sqrt(H))
    kidx = 4
    for l in range(L):
        in_dim = I if l == 0 else H
        bound = 1.0 / jnp.sqrt(H)
        params[f"w_ih{l}"] = uni(keys[kidx + 0], (in_dim, 4 * H), bound)
        params[f"w_hh{l}"] = uni(keys[kidx + 1], (H, 4 * H), bound)
        params[f"b_l{l}"] = (uni(keys[kidx + 2], (1, 4 * H), bound)
                             + uni(keys[kidx + 3], (1, 4 * H), bound))   # b_ih + b_hh
        kidx += 4
    return params


def _reference_forward(x, params, *, num_layers, hidden, in_size, out_dims):
    """Pure-JAX f32 reference of the same forward pass (correctness check)."""
    B, T, F = x.shape
    H = hidden
    h = x @ params["w1"] + params["b1"]                     # (B, T, I)
    seq = jnp.transpose(h, (1, 0, 2))                       # (T, B, I)
    for l in range(num_layers):
        w_ih, w_hh, b = params[f"w_ih{l}"], params[f"w_hh{l}"], params[f"b_l{l}"]
        h_t = jnp.zeros((B, H), jnp.float32)
        c_t = jnp.zeros((B, H), jnp.float32)
        outs = []
        for t in range(T):
            gates = seq[t] @ w_ih + h_t @ w_hh + b
            i_g = jax.nn.sigmoid(gates[:, 0 * H:1 * H])
            f_g = jax.nn.sigmoid(gates[:, 1 * H:2 * H])
            g_g = jnp.tanh(gates[:, 2 * H:3 * H])
            o_g = jax.nn.sigmoid(gates[:, 3 * H:4 * H])
            c_t = f_g * c_t + i_g * g_g
            h_t = o_g * jnp.tanh(c_t)
            outs.append(h_t)
        seq = jnp.stack(outs, axis=0)                       # (T, B, H)
    y = jax.nn.sigmoid(seq @ params["w2"] + params["b2"])   # (T, B, O)
    return jnp.squeeze(jnp.transpose(y, (1, 0, 2)))


if __name__ == "__main__":
    # Hyper-parameters (fixed "trial" suggestions) and small test shapes.
    NUM_FEATURES = 124
    INPUT_SIZE = 32      # trial.suggest_int('input_size_LSTM', 20, 60)
    HIDDEN = 32          # trial.suggest_int('n_hidden_units', 5, 60)
    NUM_LAYERS = 2       # trial.suggest_int('num_layers', 1, 5)
    OUT_DIMS = 6
    BATCH, SEQ = 2, 8

    key = jax.random.PRNGKey(0)
    k_x, k_p = jax.random.split(key)
    x = jax.random.normal(k_x, (BATCH, SEQ, NUM_FEATURES), jnp.float32)
    params = _init_params(k_p, NUM_FEATURES, INPUT_SIZE, HIDDEN, OUT_DIMS, NUM_LAYERS)

    # Constant prep runs exactly once (outside the per-call path).
    prepped = prepare_params(params, num_layers=NUM_LAYERS, hidden=HIDDEN,
                             num_features=NUM_FEATURES, out_dims=OUT_DIMS)

    out = causal_temporal_lstm_forward(
        x, prepped, num_layers=NUM_LAYERS, hidden=HIDDEN,
        out_dims=OUT_DIMS, num_features=NUM_FEATURES)
    out = jax.block_until_ready(out)

    ref = _reference_forward(
        x, params, num_layers=NUM_LAYERS, hidden=HIDDEN,
        in_size=INPUT_SIZE, out_dims=OUT_DIMS)
    assert out.shape == (BATCH, SEQ, OUT_DIMS), out.shape
    # bf16 MXU operands (f32 accumulation) + the folded linear1 introduce
    # ~1e-3-level deviations; well within this tolerance.
    assert jnp.allclose(out, ref, atol=2e-2, rtol=2e-2), "mismatch vs reference"

    print("KERNEL_OK")
</pallas_src>

<mosaic_0001>
module attributes {stable_mosaic.version = 11 : i64} {
  func.func @kernel(%arg0: memref<16x128xbf16, #tpu.memory_space<vmem>>, %arg1: memref<128x128xbf16, #tpu.memory_space<vmem>>, %arg2: memref<1x128xf32, #tpu.memory_space<vmem>>, %arg3: memref<128x128xbf16, #tpu.memory_space<vmem>>, %arg4: memref<128x128xbf16, #tpu.memory_space<vmem>>, %arg5: memref<128x128xbf16, #tpu.memory_space<vmem>>, %arg6: memref<1x128xf32, #tpu.memory_space<vmem>>, %arg7: memref<128x6xbf16, #tpu.memory_space<vmem>>, %arg8: memref<1x6xf32, #tpu.memory_space<vmem>>, %arg9: memref<16x6xf32, #tpu.memory_space<vmem>>, %arg10: memref<16x128xf32, #tpu.memory_space<vmem>>, %arg11: memref<16x128xf32, #tpu.memory_space<vmem>>) attributes {dimension_semantics = [], scalar_prefetch = 0 : i64, scratch_operands = 2 : i64, tpu.core_type = #tpu.core_type<tc>} {
    %c0 = arith.constant 0 : index
    %c0_0 = arith.constant 0 : index
    %0 = vector.load %arg0[%c0, %c0_0] : memref<16x128xbf16, #tpu.memory_space<vmem>>, vector<16x128xbf16>
    %c0_1 = arith.constant 0 : index
    %c0_2 = arith.constant 0 : index
    %1 = vector.load %arg1[%c0_1, %c0_2] : memref<128x128xbf16, #tpu.memory_space<vmem>>, vector<128x128xbf16>
    %cst = arith.constant dense<0.000000e+00> : vector<16x128xf32>
    %2 = tpu.matmul %0, %1, %cst {dimension_numbers = #tpu.dot_dimension_numbers<[1], [0], [0], [1], [0, 0, 1, 1], [], []>} : vector<16x128xbf16>, vector<128x128xbf16>, vector<16x128xf32> -> vector<16x128xf32>
    %c0_3 = arith.constant 0 : index
    %c0_4 = arith.constant 0 : index
    %3 = vector.load %arg2[%c0_3, %c0_4] : memref<1x128xf32, #tpu.memory_space<vmem>>, vector<1x128xf32>
    %4 = vector.broadcast %3 : vector<1x128xf32> to vector<16x128xf32>
    %5 = arith.addf %2, %4 : vector<16x128xf32>
    %c0_5 = arith.constant 0 : index
    %c0_6 = arith.constant 0 : index
    %6 = vector.load %arg10[%c0_5, %c0_6] : memref<16x128xf32, #tpu.memory_space<vmem>>, vector<16x128xf32>
    tpu.vector_store %arg10[%c0_5, %c0_6], %5 {strides = array<i32>} : memref<16x128xf32, #tpu.memory_space<vmem>>, vector<16x128xf32>,
    %c0_7 = arith.constant 0 : index
    %c0_8 = arith.constant 0 : index
    %7 = vector.load %arg3[%c0_7, %c0_8] : memref<128x128xbf16, #tpu.memory_space<vmem>>, vector<128x128xbf16>
    %cst_9 = arith.constant 0.000000e+00 : f32
    %8 = vector.broadcast %cst_9 : f32 to vector<2x128xf32>
    %cst_10 = arith.constant 0.000000e+00 : f32
    %9 = vector.broadcast %cst_10 : f32 to vector<2x128xf32>
    %c0_11 = arith.constant 0 : index
    %c0_12 = arith.constant 0 : index
    %10 = vector.load %arg10[%c0_11, %c0_12] : memref<16x128xf32, #tpu.memory_space<vmem>>, vector<2x128xf32>
    %11 = arith.truncf %8 : vector<2x128xf32> to vector<2x128xbf16>
    %cst_13 = arith.constant dense<0.000000e+00> : vector<2x128xf32>
    %12 = tpu.matmul %11, %7, %cst_13 {dimension_numbers = #tpu.dot_dimension_numbers<[1], [0], [0], [1], [0, 0, 1, 1], [], []>} : vector<2x128xbf16>, vector<128x128xbf16>, vector<2x128xf32> -> vector<2x128xf32>
    %13 = arith.addf %10, %12 : vector<2x128xf32>
    %14 = arith.negf %13 : vector<2x128xf32>
    %15 = math.exp %14 : vector<2x128xf32>
    %cst_14 = arith.constant 1.000000e+00 : f32
    %16 = vector.broadcast %cst_14 : f32 to vector<2x128xf32>
    %17 = arith.addf %16, %15 : vector<2x128xf32>
    %18 = arith.divf %16, %17 : vector<2x128xf32>
    %19 = math.tanh %13 : vector<2x128xf32>
    %c32_i32 = arith.constant 32 : i32
    %20 = tpu.dynamic_rotate %18 by %c32_i32 dim 1 : vector<2x128xf32>, i32 -> vector<2x128xf32>
    %21 = arith.mulf %20, %19 : vector<2x128xf32>
    %22 = arith.mulf %18, %9 : vector<2x128xf32>
    %c64_i32 = arith.constant 64 : i32
    %23 = tpu.dynamic_rotate %21 by %c64_i32 dim 1 : vector<2x128xf32>, i32 -> vector<2x128xf32>
    %24 = arith.addf %23, %22 : vector<2x128xf32>
    %25 = math.tanh %24 : vector<2x128xf32>
    %26 = arith.mulf %20, %25 : vector<2x128xf32>
    %c0_15 = arith.constant 0 : index
    %c0_16 = arith.constant 0 : index
    %27 = vector.load %arg11[%c0_15, %c0_16] : memref<16x128xf32, #tpu.memory_space<vmem>>, vector<2x128xf32>
    tpu.vector_store %arg11[%c0_15, %c0_16], %26 {strides = array<i32>} : memref<16x128xf32, #tpu.memory_space<vmem>>, vector<2x128xf32>,
    %c2 = arith.constant 2 : index
    %c0_17 = arith.constant 0 : index
    %28 = vector.load %arg10[%c2, %c0_17] : memref<16x128xf32, #tpu.memory_space<vmem>>, vector<2x128xf32>
    %29 = arith.truncf %26 : vector<2x128xf32> to vector<2x128xbf16>
    %cst_18 = arith.constant dense<0.000000e+00> : vector<2x128xf32>
    %30 = tpu.matmul %29, %7, %cst_18 {dimension_numbers = #tpu.dot_dimension_numbers<[1], [0], [0], [1], [0, 0, 1, 1], [], []>} : vector<2x128xbf16>, vector<128x128xbf16>, vector<2x128xf32> -> vector<2x128xf32>
    %31 = arith.addf %28, %30 : vector<2x128xf32>
    %32 = arith.negf %31 : vector<2x128xf32>
    %33 = math.exp %32 : vector<2x128xf32>
    %cst_19 = arith.constant 1.000000e+00 : f32
    %34 = vector.broadcast %cst_19 : f32 to vector<2x128xf32>
    %35 = arith.addf %34, %33 : vector<2x128xf32>
    %36 = arith.divf %34, %35 : vector<2x128xf32>
    %37 = math.tanh %31 : vector<2x128xf32>
    %c32_i32_20 = arith.constant 32 : i32
    %38 = tpu.dynamic_rotate %36 by %c32_i32_20 dim 1 : vector<2x128xf32>, i32 -> vector<2x128xf32>
    %39 = arith.mulf %38, %37 : vector<2x128xf32>
    %40 = arith.mulf %36, %24 : vector<2x128xf32>
    %c64_i32_21 = arith.constant 64 : i32
    %41 = tpu.dynamic_rotate %39 by %c64_i32_21 dim 1 : vector<2x128xf32>, i32 -> vector<2x128xf32>
    %42 = arith.addf %41, %40 : vector<2x128xf32>
    %43 = math.tanh %42 : vector<2x128xf32>
    %44 = arith.mulf %38, %43 : vector<2x128xf32>
    %c2_22 = arith.constant 2 : index
    %c0_23 = arith.constant 0 : index
    %45 = vector.load %arg11[%c2_22, %c0_23] : memref<16x128xf32, #tpu.memory_space<vmem>>, vector<2x128xf32>
    tpu.vector_store %arg11[%c2_22, %c0_23], %44 {strides = array<i32>} : memref<16x128xf32, #tpu.memory_space<vmem>>, vector<2x128xf32>,
    %c4 = arith.constant 4 : index
    %c0_24 = arith.constant 0 : index
    %46 = vector.load %arg10[%c4, %c0_24] : memref<16x128xf32, #tpu.memory_space<vmem>>, vector<2x128xf32>
    %47 = arith.truncf %44 : vector<2x128xf32> to vector<2x128xbf16>
    %cst_25 = arith.constant dense<0.000000e+00> : vector<2x128xf32>
    %48 = tpu.matmul %47, %7, %cst_25 {dimension_numbers = #tpu.dot_dimension_numbers<[1], [0], [0], [1], [0, 0, 1, 1], [], []>} : vector<2x128xbf16>, vector<128x128xbf16>, vector<2x128xf32> -> vector<2x128xf32>
    %49 = arith.addf %46, %48 : vector<2x128xf32>
    %50 = arith.negf %49 : vector<2x128xf32>
    %51 = math.exp %50 : vector<2x128xf32>
    %cst_26 = arith.constant 1.000000e+00 : f32
    %52 = vector.broadcast %cst_26 : f32 to vector<2x128xf32>
    %53 = arith.addf %52, %51 : vector<2x128xf32>
    %54 = arith.divf %52, %53 : vector<2x128xf32>
    %55 = math.tanh %49 : vector<2x128xf32>
    %c32_i32_27 = arith.constant 32 : i32
    %56 = tpu.dynamic_rotate %54 by %c32_i32_27 dim 1 : vector<2x128xf32>, i32 -> vector<2x128xf32>
    %57 = arith.mulf %56, %55 : vector<2x128xf32>
    %58 = arith.mulf %54, %42 : vector<2x128xf32>
    %c64_i32_28 = arith.constant 64 : i32
    %59 = tpu.dynamic_rotate %57 by %c64_i32_28 dim 1 : vector<2x128xf32>, i32 -> vector<2x128xf32>
    %60 = arith.addf %59, %58 : vector<2x128xf32>
    %61 = math.tanh %60 : vector<2x128xf32>
    %62 = arith.mulf %56, %61 : vector<2x128xf32>
    %c4_29 = arith.constant 4 : index
    %c0_30 = arith.constant 0 : index
    %63 = vector.load %arg11[%c4_29, %c0_30] : memref<16x128xf32, #tpu.memory_space<vmem>>, vector<2x128xf32>
    tpu.vector_store %arg11[%c4_29, %c0_30], %62 {strides = array<i32>} : memref<16x128xf32, #tpu.memory_space<vmem>>, vector<2x128xf32>,
    %c6 = arith.constant 6 : index
    %c0_31 = arith.constant 0 : index
    %64 = vector.load %arg10[%c6, %c0_31] : memref<16x128xf32, #tpu.memory_space<vmem>>, vector<2x128xf32>
    %65 = arith.truncf %62 : vector<2x128xf32> to vector<2x128xbf16>
    %cst_32 = arith.constant dense<0.000000e+00> : vector<2x128xf32>
    %66 = tpu.matmul %65, %7, %cst_32 {dimension_numbers = #tpu.dot_dimension_numbers<[1], [0], [0], [1], [0, 0, 1, 1], [], []>} : vector<2x128xbf16>, vector<128x128xbf16>, vector<2x128xf32> -> vector<2x128xf32>
    %67 = arith.addf %64, %66 : vector<2x128xf32>
    %68 = arith.negf %67 : vector<2x128xf32>
    %69 = math.exp %68 : vector<2x128xf32>
    %cst_33 = arith.constant 1.000000e+00 : f32
    %70 = vector.broadcast %cst_33 : f32 to vector<2x128xf32>
    %71 = arith.addf %70, %69 : vector<2x128xf32>
    %72 = arith.divf %70, %71 : vector<2x128xf32>
    %73 = math.tanh %67 : vector<2x128xf32>
    %c32_i32_34 = arith.constant 32 : i32
    %74 = tpu.dynamic_rotate %72 by %c32_i32_34 dim 1 : vector<2x128xf32>, i32 -> vector<2x128xf32>
    %75 = arith.mulf %74, %73 : vector<2x128xf32>
    %76 = arith.mulf %72, %60 : vector<2x128xf32>
    %c64_i32_35 = arith.constant 64 : i32
    %77 = tpu.dynamic_rotate %75 by %c64_i32_35 dim 1 : vector<2x128xf32>, i32 -> vector<2x128xf32>
    %78 = arith.addf %77, %76 : vector<2x128xf32>
    %79 = math.tanh %78 : vector<2x128xf32>
    %80 = arith.mulf %74, %79 : vector<2x128xf32>
    %c6_36 = arith.constant 6 : index
    %c0_37 = arith.constant 0 : index
    %81 = vector.load %arg11[%c6_36, %c0_37] : memref<16x128xf32, #tpu.memory_space<vmem>>, vector<2x128xf32>
    tpu.vector_store %arg11[%c6_36, %c0_37], %80 {strides = array<i32>} : memref<16x128xf32, #tpu.memory_space<vmem>>, vector<2x128xf32>,
    %c8 = arith.constant 8 : index
    %c0_38 = arith.constant 0 : index
    %82 = vector.load %arg10[%c8, %c0_38] : memref<16x128xf32, #tpu.memory_space<vmem>>, vector<2x128xf32>
    %83 = arith.truncf %80 : vector<2x128xf32> to vector<2x128xbf16>
    %cst_39 = arith.constant dense<0.000000e+00> : vector<2x128xf32>
    %84 = tpu.matmul %83, %7, %cst_39 {dimension_numbers = #tpu.dot_dimension_numbers<[1], [0], [0], [1], [0, 0, 1, 1], [], []>} : vector<2x128xbf16>, vector<128x128xbf16>, vector<2x128xf32> -> vector<2x128xf32>
    %85 = arith.addf %82, %84 : vector<2x128xf32>
    %86 = arith.negf %85 : vector<2x128xf32>
    %87 = math.exp %86 : vector<2x128xf32>
    %cst_40 = arith.constant 1.000000e+00 : f32
    %88 = vector.broadcast %cst_40 : f32 to vector<2x128xf32>
    %89 = arith.addf %88, %87 : vector<2x128xf32>
    %90 = arith.divf %88, %89 : vector<2x128xf32>
    %91 = math.tanh %85 : vector<2x128xf32>
    %c32_i32_41 = arith.constant 32 : i32
    %92 = tpu.dynamic_rotate %90 by %c32_i32_41 dim 1 : vector<2x128xf32>, i32 -> vector<2x128xf32>
    %93 = arith.mulf %92, %91 : vector<2x128xf32>
    %94 = arith.mulf %90, %78 : vector<2x128xf32>
    %c64_i32_42 = arith.constant 64 : i32
    %95 = tpu.dynamic_rotate %93 by %c64_i32_42 dim 1 : vector<2x128xf32>, i32 -> vector<2x128xf32>
    %96 = arith.addf %95, %94 : vector<2x128xf32>
    %97 = math.tanh %96 : vector<2x128xf32>
    %98 = arith.mulf %92, %97 : vector<2x128xf32>
    %c8_43 = arith.constant 8 : index
    %c0_44 = arith.constant 0 : index
    %99 = vector.load %arg11[%c8_43, %c0_44] : memref<16x128xf32, #tpu.memory_space<vmem>>, vector<2x128xf32>
    tpu.vector_store %arg11[%c8_43, %c0_44], %98 {strides = array<i32>} : memref<16x128xf32, #tpu.memory_space<vmem>>, vector<2x128xf32>,
    %c10 = arith.constant 10 : index
    %c0_45 = arith.constant 0 : index
    %100 = vector.load %arg10[%c10, %c0_45] : memref<16x128xf32, #tpu.memory_space<vmem>>, vector<2x128xf32>
    %101 = arith.truncf %98 : vector<2x128xf32> to vector<2x128xbf16>
    %cst_46 = arith.constant dense<0.000000e+00> : vector<2x128xf32>
    %102 = tpu.matmul %101, %7, %cst_46 {dimension_numbers = #tpu.dot_dimension_numbers<[1], [0], [0], [1], [0, 0, 1, 1], [], []>} : vector<2x128xbf16>, vector<128x128xbf16>, vector<2x128xf32> -> vector<2x128xf32>
    %103 = arith.addf %100, %102 : vector<2x128xf32>
    %104 = arith.negf %103 : vector<2x128xf32>
    %105 = math.exp %104 : vector<2x128xf32>
    %cst_47 = arith.constant 1.000000e+00 : f32
    %106 = vector.broadcast %cst_47 : f32 to vector<2x128xf32>
    %107 = arith.addf %106, %105 : vector<2x128xf32>
    %108 = arith.divf %106, %107 : vector<2x128xf32>
    %109 = math.tanh %103 : vector<2x128xf32>
    %c32_i32_48 = arith.constant 32 : i32
    %110 = tpu.dynamic_rotate %108 by %c32_i32_48 dim 1 : vector<2x128xf32>, i32 -> vector<2x128xf32>
    %111 = arith.mulf %110, %109 : vector<2x128xf32>
    %112 = arith.mulf %108, %96 : vector<2x128xf32>
    %c64_i32_49 = arith.constant 64 : i32
    %113 = tpu.dynamic_rotate %111 by %c64_i32_49 dim 1 : vector<2x128xf32>, i32 -> vector<2x128xf32>
    %114 = arith.addf %113, %112 : vector<2x128xf32>
    %115 = math.tanh %114 : vector<2x128xf32>
    %116 = arith.mulf %110, %115 : vector<2x128xf32>
    %c10_50 = arith.constant 10 : index
    %c0_51 = arith.constant 0 : index
    %117 = vector.load %arg11[%c10_50, %c0_51] : memref<16x128xf32, #tpu.memory_space<vmem>>, vector<2x128xf32>
    tpu.vector_store %arg11[%c10_50, %c0_51], %116 {strides = array<i32>} : memref<16x128xf32, #tpu.memory_space<vmem>>, vector<2x128xf32>,
    %c12 = arith.constant 12 : index
    %c0_52 = arith.constant 0 : index
    %118 = vector.load %arg10[%c12, %c0_52] : memref<16x128xf32, #tpu.memory_space<vmem>>, vector<2x128xf32>
    %119 = arith.truncf %116 : vector<2x128xf32> to vector<2x128xbf16>
    %cst_53 = arith.constant dense<0.000000e+00> : vector<2x128xf32>
    %120 = tpu.matmul %119, %7, %cst_53 {dimension_numbers = #tpu.dot_dimension_numbers<[1], [0], [0], [1], [0, 0, 1, 1], [], []>} : vector<2x128xbf16>, vector<128x128xbf16>, vector<2x128xf32> -> vector<2x128xf32>
    %121 = arith.addf %118, %120 : vector<2x128xf32>
    %122 = arith.negf %121 : vector<2x128xf32>
    %123 = math.exp %122 : vector<2x128xf32>
    %cst_54 = arith.constant 1.000000e+00 : f32
    %124 = vector.broadcast %cst_54 : f32 to vector<2x128xf32>
    %125 = arith.addf %124, %123 : vector<2x128xf32>
    %126 = arith.divf %124, %125 : vector<2x128xf32>
    %127 = math.tanh %121 : vector<2x128xf32>
    %c32_i32_55 = arith.constant 32 : i32
    %128 = tpu.dynamic_rotate %126 by %c32_i32_55 dim 1 : vector<2x128xf32>, i32 -> vector<2x128xf32>
    %129 = arith.mulf %128, %127 : vector<2x128xf32>
    %130 = arith.mulf %126, %114 : vector<2x128xf32>
    %c64_i32_56 = arith.constant 64 : i32
    %131 = tpu.dynamic_rotate %129 by %c64_i32_56 dim 1 : vector<2x128xf32>, i32 -> vector<2x128xf32>
    %132 = arith.addf %131, %130 : vector<2x128xf32>
    %133 = math.tanh %132 : vector<2x128xf32>
    %134 = arith.mulf %128, %133 : vector<2x128xf32>
    %c12_57 = arith.constant 12 : index
    %c0_58 = arith.constant 0 : index
    %135 = vector.load %arg11[%c12_57, %c0_58] : memref<16x128xf32, #tpu.memory_space<vmem>>, vector<2x128xf32>
    tpu.vector_store %arg11[%c12_57, %c0_58], %134 {strides = array<i32>} : memref<16x128xf32, #tpu.memory_space<vmem>>, vector<2x128xf32>,
    %c14 = arith.constant 14 : index
    %c0_59 = arith.constant 0 : index
    %136 = vector.load %arg10[%c14, %c0_59] : memref<16x128xf32, #tpu.memory_space<vmem>>, vector<2x128xf32>
    %137 = arith.truncf %134 : vector<2x128xf32> to vector<2x128xbf16>
    %cst_60 = arith.constant dense<0.000000e+00> : vector<2x128xf32>
    %138 = tpu.matmul %137, %7, %cst_60 {dimension_numbers = #tpu.dot_dimension_numbers<[1], [0], [0], [1], [0, 0, 1, 1], [], []>} : vector<2x128xbf16>, vector<128x128xbf16>, vector<2x128xf32> -> vector<2x128xf32>
    %139 = arith.addf %136, %138 : vector<2x128xf32>
    %140 = arith.negf %139 : vector<2x128xf32>
    %141 = math.exp %140 : vector<2x128xf32>
    %cst_61 = arith.constant 1.000000e+00 : f32
    %142 = vector.broadcast %cst_61 : f32 to vector<2x128xf32>
    %143 = arith.addf %142, %141 : vector<2x128xf32>
    %144 = arith.divf %142, %143 : vector<2x128xf32>
    %145 = math.tanh %139 : vector<2x128xf32>
    %c32_i32_62 = arith.constant 32 : i32
    %146 = tpu.dynamic_rotate %144 by %c32_i32_62 dim 1 : vector<2x128xf32>, i32 -> vector<2x128xf32>
    %147 = arith.mulf %146, %145 : vector<2x128xf32>
    %148 = arith.mulf %144, %132 : vector<2x128xf32>
    %c64_i32_63 = arith.constant 64 : i32
    %149 = tpu.dynamic_rotate %147 by %c64_i32_63 dim 1 : vector<2x128xf32>, i32 -> vector<2x128xf32>
    %150 = arith.addf %149, %148 : vector<2x128xf32>
    %151 = math.tanh %150 : vector<2x128xf32>
    %152 = arith.mulf %146, %151 : vector<2x128xf32>
    %c14_64 = arith.constant 14 : index
    %c0_65 = arith.constant 0 : index
    %153 = vector.load %arg11[%c14_64, %c0_65] : memref<16x128xf32, #tpu.memory_space<vmem>>, vector<2x128xf32>
    tpu.vector_store %arg11[%c14_64, %c0_65], %152 {strides = array<i32>} : memref<16x128xf32, #tpu.memory_space<vmem>>, vector<2x128xf32>,
    %c0_66 = arith.constant 0 : index
    %c0_67 = arith.constant 0 : index
    %154 = vector.load %arg11[%c0_66, %c0_67] : memref<16x128xf32, #tpu.memory_space<vmem>>, vector<16x128xf32>
    %155 = arith.truncf %154 : vector<16x128xf32> to vector<16x128xbf16>
    %c0_68 = arith.constant 0 : index
    %c0_69 = arith.constant 0 : index
    %156 = vector.load %arg5[%c0_68, %c0_69] : memref<128x128xbf16, #tpu.memory_space<vmem>>, vector<128x128xbf16>
    %cst_70 = arith.constant dense<0.000000e+00> : vector<16x128xf32>
    %157 = tpu.matmul %155, %156, %cst_70 {dimension_numbers = #tpu.dot_dimension_numbers<[1], [0], [0], [1], [0, 0, 1, 1], [], []>} : vector<16x128xbf16>, vector<128x128xbf16>, vector<16x128xf32> -> vector<16x128xf32>
    %c0_71 = arith.constant 0 : index
    %c0_72 = arith.constant 0 : index
    %158 = vector.load %arg6[%c0_71, %c0_72] : memref<1x128xf32, #tpu.memory_space<vmem>>, vector<1x128xf32>
    %159 = vector.broadcast %158 : vector<1x128xf32> to vector<16x128xf32>
    %160 = arith.addf %157, %159 : vector<16x128xf32>
    %c0_73 = arith.constant 0 : index
    %c0_74 = arith.constant 0 : index
    %161 = vector.load %arg10[%c0_73, %c0_74] : memref<16x128xf32, #tpu.memory_space<vmem>>, vector<16x128xf32>
    tpu.vector_store %arg10[%c0_73, %c0_74], %160 {strides = array<i32>} : memref<16x128xf32, #tpu.memory_space<vmem>>, vector<16x128xf32>,
    %c0_75 = arith.constant 0 : index
    %c0_76 = arith.constant 0 : index
    %162 = vector.load %arg4[%c0_75, %c0_76] : memref<128x128xbf16, #tpu.memory_space<vmem>>, vector<128x128xbf16>
    %cst_77 = arith.constant 0.000000e+00 : f32
    %163 = vector.broadcast %cst_77 : f32 to vector<2x128xf32>
    %cst_78 = arith.constant 0.000000e+00 : f32
    %164 = vector.broadcast %cst_78 : f32 to vector<2x128xf32>
    %c0_79 = arith.constant 0 : index
    %c0_80 = arith.constant 0 : index
    %165 = vector.load %arg10[%c0_79, %c0_80] : memref<16x128xf32, #tpu.memory_space<vmem>>, vector<2x128xf32>
    %166 = arith.truncf %163 : vector<2x128xf32> to vector<2x128xbf16>
    %cst_81 = arith.constant dense<0.000000e+00> : vector<2x128xf32>
    %167 = tpu.matmul %166, %162, %cst_81 {dimension_numbers = #tpu.dot_dimension_numbers<[1], [0], [0], [1], [0, 0, 1, 1], [], []>} : vector<2x128xbf16>, vector<128x128xbf16>, vector<2x128xf32> -> vector<2x128xf32>
    %168 = arith.addf %165, %167 : vector<2x128xf32>
    %169 = arith.negf %168 : vector<2x128xf32>
    %170 = math.exp %169 : vector<2x128xf32>
    %cst_82 = arith.constant 1.000000e+00 : f32
    %171 = vector.broadcast %cst_82 : f32 to vector<2x128xf32>
    %172 = arith.addf %171, %170 : vector<2x128xf32>
    %173 = arith.divf %171, %172 : vector<2x128xf32>
    %174 = math.tanh %168 : vector<2x128xf32>
    %c32_i32_83 = arith.constant 32 : i32
    %175 = tpu.dynamic_rotate %173 by %c32_i32_83 dim 1 : vector<2x128xf32>, i32 -> vector<2x128xf32>
    %176 = arith.mulf %175, %174 : vector<2x128xf32>
    %177 = arith.mulf %173, %164 : vector<2x128xf32>
    %c64_i32_84 = arith.constant 64 : i32
    %178 = tpu.dynamic_rotate %176 by %c64_i32_84 dim 1 : vector<2x128xf32>, i32 -> vector<2x128xf32>
    %179 = arith.addf %178, %177 : vector<2x128xf32>
    %180 = math.tanh %179 : vector<2x128xf32>
    %181 = arith.mulf %175, %180 : vector<2x128xf32>
    %c0_85 = arith.constant 0 : index
    %c0_86 = arith.constant 0 : index
    %182 = vector.load %arg11[%c0_85, %c0_86] : memref<16x128xf32, #tpu.memory_space<vmem>>, vector<2x128xf32>
    tpu.vector_store %arg11[%c0_85, %c0_86], %181 {strides = array<i32>} : memref<16x128xf32, #tpu.memory_space<vmem>>, vector<2x128xf32>,
    %c2_87 = arith.constant 2 : index
    %c0_88 = arith.constant 0 : index
    %183 = vector.load %arg10[%c2_87, %c0_88] : memref<16x128xf32, #tpu.memory_space<vmem>>, vector<2x128xf32>
    %184 = arith.truncf %181 : vector<2x128xf32> to vector<2x128xbf16>
    %cst_89 = arith.constant dense<0.000000e+00> : vector<2x128xf32>
    %185 = tpu.matmul %184, %162, %cst_89 {dimension_numbers = #tpu.dot_dimension_numbers<[1], [0], [0], [1], [0, 0, 1, 1], [], []>} : vector<2x128xbf16>, vector<128x128xbf16>, vector<2x128xf32> -> vector<2x128xf32>
    %186 = arith.addf %183, %185 : vector<2x128xf32>
    %187 = arith.negf %186 : vector<2x128xf32>
    %188 = math.exp %187 : vector<2x128xf32>
    %cst_90 = arith.constant 1.000000e+00 : f32
    %189 = vector.broadcast %cst_90 : f32 to vector<2x128xf32>
    %190 = arith.addf %189, %188 : vector<2x128xf32>
    %191 = arith.divf %189, %190 : vector<2x128xf32>
    %192 = math.tanh %186 : vector<2x128xf32>
    %c32_i32_91 = arith.constant 32 : i32
    %193 = tpu.dynamic_rotate %191 by %c32_i32_91 dim 1 : vector<2x128xf32>, i32 -> vector<2x128xf32>
    %194 = arith.mulf %193, %192 : vector<2x128xf32>
    %195 = arith.mulf %191, %179 : vector<2x128xf32>
    %c64_i32_92 = arith.constant 64 : i32
    %196 = tpu.dynamic_rotate %194 by %c64_i32_92 dim 1 : vector<2x128xf32>, i32 -> vector<2x128xf32>
    %197 = arith.addf %196, %195 : vector<2x128xf32>
    %198 = math.tanh %197 : vector<2x128xf32>
    %199 = arith.mulf %193, %198 : vector<2x128xf32>
    %c2_93 = arith.constant 2 : index
    %c0_94 = arith.constant 0 : index
    %200 = vector.load %arg11[%c2_93, %c0_94] : memref<16x128xf32, #tpu.memory_space<vmem>>, vector<2x128xf32>
    tpu.vector_store %arg11[%c2_93, %c0_94], %199 {strides = array<i32>} : memref<16x128xf32, #tpu.memory_space<vmem>>, vector<2x128xf32>,
    %c4_95 = arith.constant 4 : index
    %c0_96 = arith.constant 0 : index
    %201 = vector.load %arg10[%c4_95, %c0_96] : memref<16x128xf32, #tpu.memory_space<vmem>>, vector<2x128xf32>
    %202 = arith.truncf %199 : vector<2x128xf32> to vector<2x128xbf16>
    %cst_97 = arith.constant dense<0.000000e+00> : vector<2x128xf32>
    %203 = tpu.matmul %202, %162, %cst_97 {dimension_numbers = #tpu.dot_dimension_numbers<[1], [0], [0], [1], [0, 0, 1, 1], [], []>} : vector<2x128xbf16>, vector<128x128xbf16>, vector<2x128xf32> -> vector<2x128xf32>
    %204 = arith.addf %201, %203 : vector<2x128xf32>
    %205 = arith.negf %204 : vector<2x128xf32>
    %206 = math.exp %205 : vector<2x128xf32>
    %cst_98 = arith.constant 1.000000e+00 : f32
    %207 = vector.broadcast %cst_98 : f32 to vector<2x128xf32>
    %208 = arith.addf %207, %206 : vector<2x128xf32>
    %209 = arith.divf %207, %208 : vector<2x128xf32>
    %210 = math.tanh %204 : vector<2x128xf32>
    %c32_i32_99 = arith.constant 32 : i32
    %211 = tpu.dynamic_rotate %209 by %c32_i32_99 dim 1 : vector<2x128xf32>, i32 -> vector<2x128xf32>
    %212 = arith.mulf %211, %210 : vector<2x128xf32>
    %213 = arith.mulf %209, %197 : vector<2x128xf32>
    %c64_i32_100 = arith.constant 64 : i32
    %214 = tpu.dynamic_rotate %212 by %c64_i32_100 dim 1 : vector<2x128xf32>, i32 -> vector<2x128xf32>
    %215 = arith.addf %214, %213 : vector<2x128xf32>
    %216 = math.tanh %215 : vector<2x128xf32>
    %217 = arith.mulf %211, %216 : vector<2x128xf32>
    %c4_101 = arith.constant 4 : index
    %c0_102 = arith.constant 0 : index
    %218 = vector.load %arg11[%c4_101, %c0_102] : memref<16x128xf32, #tpu.memory_space<vmem>>, vector<2x128xf32>
    tpu.vector_store %arg11[%c4_101, %c0_102], %217 {strides = array<i32>} : memref<16x128xf32, #tpu.memory_space<vmem>>, vector<2x128xf32>,
    %c6_103 = arith.constant 6 : index
    %c0_104 = arith.constant 0 : index
    %219 = vector.load %arg10[%c6_103, %c0_104] : memref<16x128xf32, #tpu.memory_space<vmem>>, vector<2x128xf32>
    %220 = arith.truncf %217 : vector<2x128xf32> to vector<2x128xbf16>
    %cst_105 = arith.constant dense<0.000000e+00> : vector<2x128xf32>
    %221 = tpu.matmul %220, %162, %cst_105 {dimension_numbers = #tpu.dot_dimension_numbers<[1], [0], [0], [1], [0, 0, 1, 1], [], []>} : vector<2x128xbf16>, vector<128x128xbf16>, vector<2x128xf32> -> vector<2x128xf32>
    %222 = arith.addf %219, %221 : vector<2x128xf32>
    %223 = arith.negf %222 : vector<2x128xf32>
    %224 = math.exp %223 : vector<2x128xf32>
    %cst_106 = arith.constant 1.000000e+00 : f32
    %225 = vector.broadcast %cst_106 : f32 to vector<2x128xf32>
    %226 = arith.addf %225, %224 : vector<2x128xf32>
    %227 = arith.divf %225, %226 : vector<2x128xf32>
    %228 = math.tanh %222 : vector<2x128xf32>
    %c32_i32_107 = arith.constant 32 : i32
    %229 = tpu.dynamic_rotate %227 by %c32_i32_107 dim 1 : vector<2x128xf32>, i32 -> vector<2x128xf32>
    %230 = arith.mulf %229, %228 : vector<2x128xf32>
    %231 = arith.mulf %227, %215 : vector<2x128xf32>
    %c64_i32_108 = arith.constant 64 : i32
    %232 = tpu.dynamic_rotate %230 by %c64_i32_108 dim 1 : vector<2x128xf32>, i32 -> vector<2x128xf32>
    %233 = arith.addf %232, %231 : vector<2x128xf32>
    %234 = math.tanh %233 : vector<2x128xf32>
    %235 = arith.mulf %229, %234 : vector<2x128xf32>
    %c6_109 = arith.constant 6 : index
    %c0_110 = arith.constant 0 : index
    %236 = vector.load %arg11[%c6_109, %c0_110] : memref<16x128xf32, #tpu.memory_space<vmem>>, vector<2x128xf32>
    tpu.vector_store %arg11[%c6_109, %c0_110], %235 {strides = array<i32>} : memref<16x128xf32, #tpu.memory_space<vmem>>, vector<2x128xf32>,
    %c8_111 = arith.constant 8 : index
    %c0_112 = arith.constant 0 : index
    %237 = vector.load %arg10[%c8_111, %c0_112] : memref<16x128xf32, #tpu.memory_space<vmem>>, vector<2x128xf32>
    %238 = arith.truncf %235 : vector<2x128xf32> to vector<2x128xbf16>
    %cst_113 = arith.constant dense<0.000000e+00> : vector<2x128xf32>
    %239 = tpu.matmul %238, %162, %cst_113 {dimension_numbers = #tpu.dot_dimension_numbers<[1], [0], [0], [1], [0, 0, 1, 1], [], []>} : vector<2x128xbf16>, vector<128x128xbf16>, vector<2x128xf32> -> vector<2x128xf32>
    %240 = arith.addf %237, %239 : vector<2x128xf32>
    %241 = arith.negf %240 : vector<2x128xf32>
    %242 = math.exp %241 : vector<2x128xf32>
    %cst_114 = arith.constant 1.000000e+00 : f32
    %243 = vector.broadcast %cst_114 : f32 to vector<2x128xf32>
    %244 = arith.addf %243, %242 : vector<2x128xf32>
    %245 = arith.divf %243, %244 : vector<2x128xf32>
    %246 = math.tanh %240 : vector<2x128xf32>
    %c32_i32_115 = arith.constant 32 : i32
    %247 = tpu.dynamic_rotate %245 by %c32_i32_115 dim 1 : vector<2x128xf32>, i32 -> vector<2x128xf32>
    %248 = arith.mulf %247, %246 : vector<2x128xf32>
    %249 = arith.mulf %245, %233 : vector<2x128xf32>
    %c64_i32_116 = arith.constant 64 : i32
    %250 = tpu.dynamic_rotate %248 by %c64_i32_116 dim 1 : vector<2x128xf32>, i32 -> vector<2x128xf32>
    %251 = arith.addf %250, %249 : vector<2x128xf32>
    %252 = math.tanh %251 : vector<2x128xf32>
    %253 = arith.mulf %247, %252 : vector<2x128xf32>
    %c8_117 = arith.constant 8 : index
    %c0_118 = arith.constant 0 : index
    %254 = vector.load %arg11[%c8_117, %c0_118] : memref<16x128xf32, #tpu.memory_space<vmem>>, vector<2x128xf32>
    tpu.vector_store %arg11[%c8_117, %c0_118], %253 {strides = array<i32>} : memref<16x128xf32, #tpu.memory_space<vmem>>, vector<2x128xf32>,
    %c10_119 = arith.constant 10 : index
    %c0_120 = arith.constant 0 : index
    %255 = vector.load %arg10[%c10_119, %c0_120] : memref<16x128xf32, #tpu.memory_space<vmem>>, vector<2x128xf32>
    %256 = arith.truncf %253 : vector<2x128xf32> to vector<2x128xbf16>
    %cst_121 = arith.constant dense<0.000000e+00> : vector<2x128xf32>
    %257 = tpu.matmul %256, %162, %cst_121 {dimension_numbers = #tpu.dot_dimension_numbers<[1], [0], [0], [1], [0, 0, 1, 1], [], []>} : vector<2x128xbf16>, vector<128x128xbf16>, vector<2x128xf32> -> vector<2x128xf32>
    %258 = arith.addf %255, %257 : vector<2x128xf32>
    %259 = arith.negf %258 : vector<2x128xf32>
    %260 = math.exp %259 : vector<2x128xf32>
    %cst_122 = arith.constant 1.000000e+00 : f32
    %261 = vector.broadcast %cst_122 : f32 to vector<2x128xf32>
    %262 = arith.addf %261, %260 : vector<2x128xf32>
    %263 = arith.divf %261, %262 : vector<2x128xf32>
    %264 = math.tanh %258 : vector<2x128xf32>
    %c32_i32_123 = arith.constant 32 : i32
    %265 = tpu.dynamic_rotate %263 by %c32_i32_123 dim 1 : vector<2x128xf32>, i32 -> vector<2x128xf32>
    %266 = arith.mulf %265, %264 : vector<2x128xf32>
    %267 = arith.mulf %263, %251 : vector<2x128xf32>
    %c64_i32_124 = arith.constant 64 : i32
    %268 = tpu.dynamic_rotate %266 by %c64_i32_124 dim 1 : vector<2x128xf32>, i32 -> vector<2x128xf32>
    %269 = arith.addf %268, %267 : vector<2x128xf32>
    %270 = math.tanh %269 : vector<2x128xf32>
    %271 = arith.mulf %265, %270 : vector<2x128xf32>
    %c10_125 = arith.constant 10 : index
    %c0_126 = arith.constant 0 : index
    %272 = vector.load %arg11[%c10_125, %c0_126] : memref<16x128xf32, #tpu.memory_space<vmem>>, vector<2x128xf32>
    tpu.vector_store %arg11[%c10_125, %c0_126], %271 {strides = array<i32>} : memref<16x128xf32, #tpu.memory_space<vmem>>, vector<2x128xf32>,
    %c12_127 = arith.constant 12 : index
    %c0_128 = arith.constant 0 : index
    %273 = vector.load %arg10[%c12_127, %c0_128] : memref<16x128xf32, #tpu.memory_space<vmem>>, vector<2x128xf32>
    %274 = arith.truncf %271 : vector<2x128xf32> to vector<2x128xbf16>
    %cst_129 = arith.constant dense<0.000000e+00> : vector<2x128xf32>
    %275 = tpu.matmul %274, %162, %cst_129 {dimension_numbers = #tpu.dot_dimension_numbers<[1], [0], [0], [1], [0, 0, 1, 1], [], []>} : vector<2x128xbf16>, vector<128x128xbf16>, vector<2x128xf32> -> vector<2x128xf32>
    %276 = arith.addf %273, %275 : vector<2x128xf32>
    %277 = arith.negf %276 : vector<2x128xf32>
    %278 = math.exp %277 : vector<2x128xf32>
    %cst_130 = arith.constant 1.000000e+00 : f32
    %279 = vector.broadcast %cst_130 : f32 to vector<2x128xf32>
    %280 = arith.addf %279, %278 : vector<2x128xf32>
    %281 = arith.divf %279, %280 : vector<2x128xf32>
    %282 = math.tanh %276 : vector<2x128xf32>
    %c32_i32_131 = arith.constant 32 : i32
    %283 = tpu.dynamic_rotate %281 by %c32_i32_131 dim 1 : vector<2x128xf32>, i32 -> vector<2x128xf32>
    %284 = arith.mulf %283, %282 : vector<2x128xf32>
    %285 = arith.mulf %281, %269 : vector<2x128xf32>
    %c64_i32_132 = arith.constant 64 : i32
    %286 = tpu.dynamic_rotate %284 by %c64_i32_132 dim 1 : vector<2x128xf32>, i32 -> vector<2x128xf32>
    %287 = arith.addf %286, %285 : vector<2x128xf32>
    %288 = math.tanh %287 : vector<2x128xf32>
    %289 = arith.mulf %283, %288 : vector<2x128xf32>
    %c12_133 = arith.constant 12 : index
    %c0_134 = arith.constant 0 : index
    %290 = vector.load %arg11[%c12_133, %c0_134] : memref<16x128xf32, #tpu.memory_space<vmem>>, vector<2x128xf32>
    tpu.vector_store %arg11[%c12_133, %c0_134], %289 {strides = array<i32>} : memref<16x128xf32, #tpu.memory_space<vmem>>, vector<2x128xf32>,
    %c14_135 = arith.constant 14 : index
    %c0_136 = arith.constant 0 : index
    %291 = vector.load %arg10[%c14_135, %c0_136] : memref<16x128xf32, #tpu.memory_space<vmem>>, vector<2x128xf32>
    %292 = arith.truncf %289 : vector<2x128xf32> to vector<2x128xbf16>
    %cst_137 = arith.constant dense<0.000000e+00> : vector<2x128xf32>
    %293 = tpu.matmul %292, %162, %cst_137 {dimension_numbers = #tpu.dot_dimension_numbers<[1], [0], [0], [1], [0, 0, 1, 1], [], []>} : vector<2x128xbf16>, vector<128x128xbf16>, vector<2x128xf32> -> vector<2x128xf32>
    %294 = arith.addf %291, %293 : vector<2x128xf32>
    %295 = arith.negf %294 : vector<2x128xf32>
    %296 = math.exp %295 : vector<2x128xf32>
    %cst_138 = arith.constant 1.000000e+00 : f32
    %297 = vector.broadcast %cst_138 : f32 to vector<2x128xf32>
    %298 = arith.addf %297, %296 : vector<2x128xf32>
    %299 = arith.divf %297, %298 : vector<2x128xf32>
    %300 = math.tanh %294 : vector<2x128xf32>
    %c32_i32_139 = arith.constant 32 : i32
    %301 = tpu.dynamic_rotate %299 by %c32_i32_139 dim 1 : vector<2x128xf32>, i32 -> vector<2x128xf32>
    %302 = arith.mulf %301, %300 : vector<2x128xf32>
    %303 = arith.mulf %299, %287 : vector<2x128xf32>
    %c64_i32_140 = arith.constant 64 : i32
    %304 = tpu.dynamic_rotate %302 by %c64_i32_140 dim 1 : vector<2x128xf32>, i32 -> vector<2x128xf32>
    %305 = arith.addf %304, %303 : vector<2x128xf32>
    %306 = math.tanh %305 : vector<2x128xf32>
    %307 = arith.mulf %301, %306 : vector<2x128xf32>
    %c14_141 = arith.constant 14 : index
    %c0_142 = arith.constant 0 : index
    %308 = vector.load %arg11[%c14_141, %c0_142] : memref<16x128xf32, #tpu.memory_space<vmem>>, vector<2x128xf32>
    tpu.vector_store %arg11[%c14_141, %c0_142], %307 {strides = array<i32>} : memref<16x128xf32, #tpu.memory_space<vmem>>, vector<2x128xf32>,
    %c0_143 = arith.constant 0 : index
    %c0_144 = arith.constant 0 : index
    %309 = vector.load %arg11[%c0_143, %c0_144] : memref<16x128xf32, #tpu.memory_space<vmem>>, vector<16x128xf32>
    %310 = arith.truncf %309 : vector<16x128xf32> to vector<16x128xbf16>
    %c0_145 = arith.constant 0 : index
    %c0_146 = arith.constant 0 : index
    %311 = vector.load %arg7[%c0_145, %c0_146] : memref<128x6xbf16, #tpu.memory_space<vmem>>, vector<128x6xbf16>
    %cst_147 = arith.constant dense<0.000000e+00> : vector<16x6xf32>
    %312 = tpu.matmul %310, %311, %cst_147 {dimension_numbers = #tpu.dot_dimension_numbers<[1], [0], [0], [1], [0, 0, 1, 1], [], []>} : vector<16x128xbf16>, vector<128x6xbf16>, vector<16x6xf32> -> vector<16x6xf32>
    %c0_148 = arith.constant 0 : index
    %c0_149 = arith.constant 0 : index
    %313 = vector.load %arg8[%c0_148, %c0_149] : memref<1x6xf32, #tpu.memory_space<vmem>>, vector<1x6xf32>
    %314 = vector.broadcast %313 : vector<1x6xf32> to vector<16x6xf32>
    %315 = arith.addf %312, %314 : vector<16x6xf32>
    %316 = arith.negf %315 : vector<16x6xf32>
    %317 = math.exp %316 : vector<16x6xf32>
    %cst_150 = arith.constant 1.000000e+00 : f32
    %318 = vector.broadcast %cst_150 : f32 to vector<16x6xf32>
    %319 = arith.addf %318, %317 : vector<16x6xf32>
    %320 = arith.divf %318, %319 : vector<16x6xf32>
    %c0_151 = arith.constant 0 : index
    %c0_152 = arith.constant 0 : index
    %321 = vector.load %arg9[%c0_151, %c0_152] : memref<16x6xf32, #tpu.memory_space<vmem>>, vector<16x6xf32>
    tpu.vector_store %arg9[%c0_151, %c0_152], %320 {strides = array<i32>} : memref<16x6xf32, #tpu.memory_space<vmem>>, vector<16x6xf32>,
    return
  }
}

</mosaic_0001>

<llo_original>
// kernel: causal_temporal_lstm_forward.1
$region0: #{causal_temporal_lstm_forward.1}
  #allocation0 [shape = 'u32[]', space=smem, size = 0x4, offset = 0x4, fixed_abs, tag = 'smem constant byte address 0x4 - core index']
  #allocation1 [shape = 'u32[72,128]{1,0:T(1,128)}', space=vmem, size = 0x9000, scoped, tag = 'internal scratch']
  #allocation2 [shape = 'f32[16,128]{1,0:T(8,128)}', space=vmem, size = 0x2000, scoped, tag = 'scratch operand']
  #allocation3 [shape = 'f32[16,128]{1,0:T(8,128)}', space=vmem, size = 0x2000, scoped, tag = 'scratch operand']
  %s0 = inlined_call_operand.vmem [shape: bf16[16,128], index: 0, kind: input, shape index: {}]
  %s1 = inlined_call_operand.vmem [shape: bf16[128,128], index: 1, kind: input, shape index: {}]
  %s2 = inlined_call_operand.hbm [shape: f32[1,128], index: 2, kind: input, shape index: {}]
  %s3 = inlined_call_operand.vmem [shape: bf16[128,128], index: 3, kind: input, shape index: {}]
  %s4 = inlined_call_operand.hbm [shape: bf16[128,128], index: 4, kind: input, shape index: {}]
  %s5 = inlined_call_operand.hbm [shape: bf16[128,128], index: 5, kind: input, shape index: {}]
  %s6 = inlined_call_operand.hbm [shape: f32[1,128], index: 6, kind: input, shape index: {}]
  %s7 = inlined_call_operand.vmem [shape: bf16[128,6], index: 7, kind: input, shape index: {}]
  %s8 = inlined_call_operand.vmem [shape: f32[1,6], index: 8, kind: input, shape index: {}]
  %s9 = inlined_call_operand.vmem [shape: f32[16,6], index: 9, kind: output, shape index: {}]
  %s10 = sld [smem:[#allocation0]]
  $region62: #{causal_temporal_lstm_forward.1} parent=0
    _
  %s12 = ssub.s32 1, %s10
  %s13 = scalar_select 0, %s12, %s10
  $region1: #{causal_temporal_lstm_forward.1} parent=0
    #allocation4 [shape = 'u8[512]{0}', space=vmem, size = 0x400, scoped, tag = 'input window, operand 2, single buffered']
    #allocation5 [shape = 's32[1]{0}', space=sflag, size = 0x4, scoped, tag = 'scoped memory for causal_temporal_lstm_forward.1']
    #allocation6 [shape = 'u8[32768]{0}', space=vmem, size = 0x8000, scoped, tag = 'input window, operand 4, single buffered']
    #allocation7 [shape = 's32[1]{0}', space=sflag, size = 0x4, scoped, tag = 'scoped memory for causal_temporal_lstm_forward.1']
    #allocation8 [shape = 'u8[32768]{0}', space=vmem, size = 0x8000, scoped, tag = 'input window, operand 5, single buffered']
    #allocation9 [shape = 'u8[512]{0}', space=vmem, size = 0x400, scoped, tag = 'input window, operand 6, single buffered']
    #allocation10 [shape = 's32[1]{0}', space=sflag, size = 0x4, scoped, tag = 'scoped memory for causal_temporal_lstm_forward.1']
    %14 = vsyncpa [#allocation5], 0
    %15 = vsyncpa [#allocation7], 0
    %16 = vsyncpa [#allocation10], 0
    // Predicated region
    $region2: #{causal_temporal_lstm_forward.1} parent=1 // pred_check
      _
    $region3: #{causal_temporal_lstm_forward.1} parent=1 // pred_check_branch
      %18 = sbr.rel (0) target = $region5
    $region4: #{causal_temporal_lstm_forward.1} parent=1 // pred_region
      _
    $region5: #{causal_temporal_lstm_forward.1} parent=1 // pred_fallthru
      _
    // Predicated region
    $region6: #{causal_temporal_lstm_forward.1} parent=1 // pred_check
      _
    $region7: #{causal_temporal_lstm_forward.1} parent=1 // pred_check_branch
      %20 = sbr.rel (0) target = $region9
    $region8: #{causal_temporal_lstm_forward.1} parent=1 // pred_region
      _
    $region9: #{causal_temporal_lstm_forward.1} parent=1 // pred_fallthru
      _
    // Predicated region
    $region10: #{causal_temporal_lstm_forward.1} parent=1 // pred_check
      _
    $region11: #{causal_temporal_lstm_forward.1} parent=1 // pred_check_branch
      %22 = sbr.rel (0) target = $region13
    $region12: #{causal_temporal_lstm_forward.1} parent=1 // pred_region
      %24 = vsyncadd [#allocation5], 0
      %s26 = sshll.u32 %s2, 4
      %s27 = int_to_ptr.hbm [resolvable:$true] %s26
      %s28 = sshll.u32 [#allocation4], 4
      %s29 = int_to_ptr.vmem [resolvable:$true] %s28
      %31 = dma.hbm_to_vmem [thread:$0]  %s27, 16, %s29, [#allocation5]
    $region13: #{causal_temporal_lstm_forward.1} parent=1 // pred_fallthru
      _
    // Predicated region
    $region14: #{causal_temporal_lstm_forward.1} parent=1 // pred_check
      _
    $region15: #{causal_temporal_lstm_forward.1} parent=1 // pred_check_branch
      %33 = sbr.rel (0) target = $region17
    $region16: #{causal_temporal_lstm_forward.1} parent=1 // pred_region
      _
    $region17: #{causal_temporal_lstm_forward.1} parent=1 // pred_fallthru
      _
    // Predicated region
    $region18: #{causal_temporal_lstm_forward.1} parent=1 // pred_check
      _
    $region19: #{causal_temporal_lstm_forward.1} parent=1 // pred_check_branch
      %35 = sbr.rel (0) target = $region21
    $region20: #{causal_temporal_lstm_forward.1} parent=1 // pred_region
      %37 = vsyncadd [#allocation7], 0
      %s38 = sshll.u32 %s4, 4
      %s39 = int_to_ptr.hbm [resolvable:$true] %s38
      %s40 = sshll.u32 [#allocation6], 4
      %s41 = int_to_ptr.vmem [resolvable:$true] %s40
      %46 = dma.hbm_to_vmem [thread:$0]  %s39, 1024, %s41, [#allocation7], 64, 64, 4
    $region21: #{causal_temporal_lstm_forward.1} parent=1 // pred_fallthru
      _
    // Predicated region
    $region22: #{causal_temporal_lstm_forward.1} parent=1 // pred_check
      _
    $region23: #{causal_temporal_lstm_forward.1} parent=1 // pred_check_branch
      %48 = sbr.rel (0) target = $region25
    $region24: #{causal_temporal_lstm_forward.1} parent=1 // pred_region
      %50 = vsyncadd [#allocation7], 0
      %s51 = sshll.u32 %s5, 4
      %s52 = int_to_ptr.hbm [resolvable:$true] %s51
      %s53 = sshll.u32 [#allocation8], 4
      %s54 = int_to_ptr.vmem [resolvable:$true] %s53
      %59 = dma.hbm_to_vmem [thread:$0]  %s52, 1024, %s54, [#allocation7], 64, 64, 4
    $region25: #{causal_temporal_lstm_forward.1} parent=1 // pred_fallthru
      _
    // Predicated region
    $region26: #{causal_temporal_lstm_forward.1} parent=1 // pred_check
      _
    $region27: #{causal_temporal_lstm_forward.1} parent=1 // pred_check_branch
      %61 = sbr.rel (0) target = $region29
    $region28: #{causal_temporal_lstm_forward.1} parent=1 // pred_region
      %63 = vsyncadd [#allocation10], 0
      %s65 = sshll.u32 %s6, 4
      %s66 = int_to_ptr.hbm [resolvable:$true] %s65
      %s67 = sshll.u32 [#allocation9], 4
      %s68 = int_to_ptr.vmem [resolvable:$true] %s67
      %70 = dma.hbm_to_vmem [thread:$0]  %s66, 16, %s68, [#allocation10]
    $region29: #{causal_temporal_lstm_forward.1} parent=1 // pred_fallthru
      _
    // Predicated region
    $region30: #{causal_temporal_lstm_forward.1} parent=1 // pred_check
      _
    $region31: #{causal_temporal_lstm_forward.1} parent=1 // pred_check_branch
      %72 = sbr.rel (0) target = $region33
    $region32: #{causal_temporal_lstm_forward.1} parent=1 // pred_region
      _
    $region33: #{causal_temporal_lstm_forward.1} parent=1 // pred_fallthru
      _
    // Predicated region
    $region34: #{causal_temporal_lstm_forward.1} parent=1 // pred_check
      _
    $region35: #{causal_temporal_lstm_forward.1} parent=1 // pred_check_branch
      %74 = sbr.rel (0) target = $region37
    $region36: #{causal_temporal_lstm_forward.1} parent=1 // pred_region
      _
    $region37: #{causal_temporal_lstm_forward.1} parent=1 // pred_fallthru
      _
    // Predicated region
    $region38: #{causal_temporal_lstm_forward.1} parent=1 // pred_check
      _
    $region39: #{causal_temporal_lstm_forward.1} parent=1 // pred_check_branch
      %76 = sbr.rel (0) target = $region41
    $region40: #{causal_temporal_lstm_forward.1} parent=1 // pred_region
      %78 = dma.done [#allocation5], 16
    $region41: #{causal_temporal_lstm_forward.1} parent=1 // pred_fallthru
      _
    // Predicated region
    $region42: #{causal_temporal_lstm_forward.1} parent=1 // pred_check
      _
    $region43: #{causal_temporal_lstm_forward.1} parent=1 // pred_check_branch
      %80 = sbr.rel (0) target = $region45
    $region44: #{causal_temporal_lstm_forward.1} parent=1 // pred_region
      %82 = dma.done [#allocation7], 1024
    $region45: #{causal_temporal_lstm_forward.1} parent=1 // pred_fallthru
      _
    // Predicated region
    $region46: #{causal_temporal_lstm_forward.1} parent=1 // pred_check
      _
    $region47: #{causal_temporal_lstm_forward.1} parent=1 // pred_check_branch
      %84 = sbr.rel (0) target = $region49
    $region48: #{causal_temporal_lstm_forward.1} parent=1 // pred_region
      %86 = dma.done [#allocation7], 1024
    $region49: #{causal_temporal_lstm_forward.1} parent=1 // pred_fallthru
      _
    // Predicated region
    $region50: #{causal_temporal_lstm_forward.1} parent=1 // pred_check
      _
    $region51: #{causal_temporal_lstm_forward.1} parent=1 // pred_check_branch
      %88 = sbr.rel (0) target = $region53
    $region52: #{causal_temporal_lstm_forward.1} parent=1 // pred_region
      %90 = dma.done [#allocation10], 16
    $region53: #{causal_temporal_lstm_forward.1} parent=1 // pred_fallthru
      _
    %v92 = vld [vmem:[%s0] sm:$0xf]
    %v93 = vld [vmem:[%s0 + $0x4] sm:$0xf]
    %v94 = vld [vmem:[%s1] sm:$0xf]
    %v95 = vld [vmem:[%s1 + $0x4] sm:$0xf]
    %v96 = vld [vmem:[%s1 + $0x8] sm:$0xf]
    %v97 = vld [vmem:[%s1 + $0xc] sm:$0xf]
    %v98 = vld [vmem:[%s1 + $0x10] sm:$0xf]
    %v99 = vld [vmem:[%s1 + $0x14] sm:$0xf]
    %v100 = vld [vmem:[%s1 + $0x18] sm:$0xf]
    %v101 = vld [vmem:[%s1 + $0x1c] sm:$0xf]
    %v102 = vld [vmem:[%s1 + $0x20] sm:$0xf]
    %v103 = vld [vmem:[%s1 + $0x24] sm:$0xf]
    %v104 = vld [vmem:[%s1 + $0x28] sm:$0xf]
    %v105 = vld [vmem:[%s1 + $0x2c] sm:$0xf]
    %v106 = vld [vmem:[%s1 + $0x30] sm:$0xf]
    %v107 = vld [vmem:[%s1 + $0x34] sm:$0xf]
    %v108 = vld [vmem:[%s1 + $0x38] sm:$0xf]
    %v109 = vld [vmem:[%s1 + $0x3c] sm:$0xf]
    %v110 = vld [vmem:[#allocation4] sm:$0x1]
    %v112 = vperm.slane %v110, 0
    %v116 = vunpack.c.l.b16 %v92
    %v117 = vunpack.c.l.b16 %v93
    %v118 = vpack.c.b16 %v117, %v116
    %v136 = vunpack.c.l.b16 %v94
    %v137 = vunpack.c.l.b16 %v95
    %v138 = vunpack.c.l.b16 %v96
    %v139 = vunpack.c.l.b16 %v97
    %v140 = vunpack.c.l.b16 %v98
    %v141 = vunpack.c.l.b16 %v99
    %v142 = vunpack.c.l.b16 %v100
    %v143 = vunpack.c.l.b16 %v101
    %v144 = vunpack.c.l.b16 %v102
    %v145 = vunpack.c.l.b16 %v103
    %v146 = vunpack.c.l.b16 %v104
    %v147 = vunpack.c.l.b16 %v105
    %v148 = vunpack.c.l.b16 %v106
    %v149 = vunpack.c.l.b16 %v107
    %v150 = vunpack.c.l.b16 %v108
    %v151 = vunpack.c.l.b16 %v109
    %v152 = vpack.c.b16 %v137, %v136
    %v153 = vpack.c.b16 %v139, %v138
    %v154 = vpack.c.b16 %v141, %v140
    %v155 = vpack.c.b16 %v143, %v142
    %v156 = vpack.c.b16 %v145, %v144
    %v157 = vpack.c.b16 %v147, %v146
    %v158 = vpack.c.b16 %v149, %v148
    %v159 = vpack.c.b16 %v151, %v150
    %168 = vmatpush.bf16.msra.mxu0 %v159
    %169 = vmatpush.bf16.msra.mxu0 %v158
    %170 = vmatpush.bf16.msra.mxu0 %v157
    %171 = vmatpush.bf16.msra.mxu0 %v156
    %172 = vmatpush.bf16.msra.mxu0 %v155
    %173 = vmatpush.bf16.msra.mxu0 %v154
    %174 = vmatpush.bf16.msra.mxu0 %v153
    %175 = vmatpush.bf16.msra.mxu0 %v152
    %176 = vmatmul.bf16.gmra.mxu0 %v118
    %v177 = vpop.f32.mrf.mxu0
    %v178 = vadd.f32 %v112, %v177
    %v179 = vpop.f32.mrf.mxu0
    %v180 = vadd.f32 %v112, %v179
    %181 = vdwg.mxu0
    %182 = vst [vmem:[#allocation2] sm:$0xff] %v178
    %183 = vst [vmem:[#allocation2 + $0x8] sm:$0xff] %v180
    %v184 = vld [vmem:[%s3] sm:$0xf]
    %v185 = vld [vmem:[%s3 + $0x4] sm:$0xf]
    %v186 = vld [vmem:[%s3 + $0x8] sm:$0xf]
    %v187 = vld [vmem:[%s3 + $0xc] sm:$0xf]
    %v188 = vld [vmem:[%s3 + $0x10] sm:$0xf]
    %v189 = vld [vmem:[%s3 + $0x14] sm:$0xf]
    %v190 = vld [vmem:[%s3 + $0x18] sm:$0xf]
    %v191 = vld [vmem:[%s3 + $0x1c] sm:$0xf]
    %v192 = vld [vmem:[%s3 + $0x20] sm:$0xf]
    %v193 = vld [vmem:[%s3 + $0x24] sm:$0xf]
    %v194 = vld [vmem:[%s3 + $0x28] sm:$0xf]
    %v195 = vld [vmem:[%s3 + $0x2c] sm:$0xf]
    %v196 = vld [vmem:[%s3 + $0x30] sm:$0xf]
    %v197 = vld [vmem:[%s3 + $0x34] sm:$0xf]
    %v198 = vld [vmem:[%s3 + $0x38] sm:$0xf]
    %v199 = vld [vmem:[%s3 + $0x3c] sm:$0xf]
    %v200 = vld [vmem:[#allocation2] sm:$0x3]
    %v217 = vunpack.c.l.b16 %v184
    %v218 = vunpack.c.l.b16 %v185
    %v219 = vunpack.c.l.b16 %v186
    %v220 = vunpack.c.l.b16 %v187
    %v221 = vunpack.c.l.b16 %v188
    %v222 = vunpack.c.l.b16 %v189
    %v223 = vunpack.c.l.b16 %v190
    %v224 = vunpack.c.l.b16 %v191
    %v225 = vunpack.c.l.b16 %v192
    %v226 = vunpack.c.l.b16 %v193
    %v227 = vunpack.c.l.b16 %v194
    %v228 = vunpack.c.l.b16 %v195
    %v229 = vunpack.c.l.b16 %v196
    %v230 = vunpack.c.l.b16 %v197
    %v231 = vunpack.c.l.b16 %v198
    %v232 = vunpack.c.l.b16 %v199
    %v233 = vpack.c.b16 %v218, %v217
    %v234 = vpack.c.b16 %v220, %v219
    %v235 = vpack.c.b16 %v222, %v221
    %v236 = vpack.c.b16 %v224, %v223
    %v237 = vpack.c.b16 %v226, %v225
    %v238 = vpack.c.b16 %v228, %v227
    %v239 = vpack.c.b16 %v230, %v229
    %v240 = vpack.c.b16 %v232, %v231
    %249 = vmatpush.bf16.msra.mxu0 %v240
    %250 = vmatpush.bf16.msra.mxu0 %v239
    %251 = vmatpush.bf16.msra.mxu0 %v238
    %252 = vmatpush.bf16.msra.mxu0 %v237
    %253 = vmatpush.bf16.msra.mxu0 %v236
    %254 = vmatpush.bf16.msra.mxu0 %v235
    %255 = vmatpush.bf16.msra.mxu0 %v234
    %256 = vmatpush.bf16.msra.mxu0 %v233
    %257 = vmatmul.bf16.gmra.mxu0 0
    %v258 = vpop.f32.mrf.mxu0
    %v259 = vadd.f32 0.0, %v258
    %v260 = vpop.f32.mrf.mxu0
    %261 = vdwg.mxu0
    %v262 = vadd.f32 %v200, %v259
    %v263 = vxor.u32 %v262, 2147483648
    %v264 = vmul.f32 %v263, 1.442695
    %v265 = vpow.pop %v264
    %v266 = vadd.f32 %v265, 1.0
    %v267 = vrcp.pop %v266
    %v268 = vmul.f32 %v266, %v267
    %v269 = vsub.f32 1.0, %v268
    %v270 = vmul.f32 %v267, %v269
    %v271 = vadd.f32 %v267, %v270
    %vm272 = vweird.f32 %v266
    %vm273 = vweird.f32 %v267
    %vm274 = vmor %vm272, %vm273
    %v275 = vsel %vm274, %v267, %v271
    %v276 = vand.u32 2147483647, %v266
    %vm277 = vcmp.eq.f32.partialorder %v276, 8.507059e+37
    %v278 = vand.u32 %v266, 2147483648
    %v279 = vor.u32 1.1754944e-38, %v278
    %v280 = vsel %vm277, %v279, %v275
    %v281 = vmul.f32 1.0, %v280
    %v282 = vtanh.pop %v262
    %283 = vrot.lane.b32.xlu0 %v281, 32
    %v284 = vpop.permute.xlu0 %283
    %v285 = vmul.f32 %v284, %v282
    %v286 = vmul.f32 %v281, 0.0
    %287 = vrot.lane.b32.xlu0 %v285, 64
    %v288 = vpop.permute.xlu0 %287
    %v289 = vadd.f32 %v288, %v286
    %v290 = vtanh.pop %v289
    %v291 = vmul.f32 %v284, %v290
    %292 = vst [vmem:[#allocation3] sm:$0x3] %v291
    %v293 = vld [vmem:[#allocation2 + $0x2] sm:$0x3]
    %v294 = vpack.c.bf16 %v291, %v291
    %295 = vmatpush.bf16.msra.mxu0 %v240
    %296 = vmatpush.bf16.msra.mxu0 %v239
    %297 = vmatpush.bf16.msra.mxu0 %v238
    %298 = vmatpush.bf16.msra.mxu0 %v237
    %299 = vmatpush.bf16.msra.mxu0 %v236
    %300 = vmatpush.bf16.msra.mxu0 %v235
    %301 = vmatpush.bf16.msra.mxu0 %v234
    %302 = vmatpush.bf16.msra.mxu0 %v233
    %303 = vmatmul.bf16.gmra.mxu0 %v294
    %v304 = vpop.f32.mrf.mxu0
    %v305 = vadd.f32 0.0, %v304
    %v306 = vpop.f32.mrf.mxu0
    %307 = vdwg.mxu0
    %v308 = vadd.f32 %v293, %v305
    %v309 = vxor.u32 %v308, 2147483648
    %v310 = vmul.f32 %v309, 1.442695
    %v311 = vpow.pop %v310
    %v312 = vadd.f32 %v311, 1.0
    %v313 = vrcp.pop %v312
    %v314 = vmul.f32 %v312, %v313
    %v315 = vsub.f32 1.0, %v314
    %v316 = vmul.f32 %v313, %v315
    %v317 = vadd.f32 %v313, %v316
    %vm318 = vweird.f32 %v312
    %vm319 = vweird.f32 %v313
    %vm320 = vmor %vm318, %vm319
    %v321 = vsel %vm320, %v313, %v317
    %v322 = vand.u32 2147483647, %v312
    %vm323 = vcmp.eq.f32.partialorder %v322, 8.507059e+37
    %v324 = vand.u32 %v312, 2147483648
    %v325 = vor.u32 1.1754944e-38, %v324
    %v326 = vsel %vm323, %v325, %v321
    %v327 = vmul.f32 1.0, %v326
    %v328 = vtanh.pop %v308
    %329 = vrot.lane.b32.xlu0 %v327, 32
    %v330 = vpop.permute.xlu0 %329
    %v331 = vmul.f32 %v330, %v328
    %v332 = vmul.f32 %v327, %v289
    %333 = vrot.lane.b32.xlu0 %v331, 64
    %v334 = vpop.permute.xlu0 %333
    %v335 = vadd.f32 %v334, %v332
    %v336 = vtanh.pop %v335
    %v337 = vmul.f32 %v330, %v336
    %338 = vst [vmem:[#allocation3 + $0x2] sm:$0x3] %v337
    %v339 = vld [vmem:[#allocation2 + $0x4] sm:$0x3]
    %v340 = vpack.c.bf16 %v337, %v337
    %341 = vmatpush.bf16.msra.mxu0 %v240
    %342 = vmatpush.bf16.msra.mxu0 %v239
    %343 = vmatpush.bf16.msra.mxu0 %v238
    %344 = vmatpush.bf16.msra.mxu0 %v237
    %345 = vmatpush.bf16.msra.mxu0 %v236
    %346 = vmatpush.bf16.msra.mxu0 %v235
    %347 = vmatpush.bf16.msra.mxu0 %v234
    %348 = vmatpush.bf16.msra.mxu0 %v233
    %349 = vmatmul.bf16.gmra.mxu0 %v340
    %v350 = vpop.f32.mrf.mxu0
    %v351 = vadd.f32 0.0, %v350
    %v352 = vpop.f32.mrf.mxu0
    %353 = vdwg.mxu0
    %v354 = vadd.f32 %v339, %v351
    %v355 = vxor.u32 %v354, 2147483648
    %v356 = vmul.f32 %v355, 1.442695
    %v357 = vpow.pop %v356
    %v358 = vadd.f32 %v357, 1.0
    %v359 = vrcp.pop %v358
    %v360 = vmul.f32 %v358, %v359
    %v361 = vsub.f32 1.0, %v360
    %v362 = vmul.f32 %v359, %v361
    %v363 = vadd.f32 %v359, %v362
    %vm364 = vweird.f32 %v358
    %vm365 = vweird.f32 %v359
    %vm366 = vmor %vm364, %vm365
    %v367 = vsel %vm366, %v359, %v363
    %v368 = vand.u32 2147483647, %v358
    %vm369 = vcmp.eq.f32.partialorder %v368, 8.507059e+37
    %v370 = vand.u32 %v358, 2147483648
    %v371 = vor.u32 1.1754944e-38, %v370
    %v372 = vsel %vm369, %v371, %v367
    %v373 = vmul.f32 1.0, %v372
    %v374 = vtanh.pop %v354
    %375 = vrot.lane.b32.xlu0 %v373, 32
    %v376 = vpop.permute.xlu0 %375
    %v377 = vmul.f32 %v376, %v374
    %v378 = vmul.f32 %v373, %v335
    %379 = vrot.lane.b32.xlu0 %v377, 64
    %v380 = vpop.permute.xlu0 %379
    %v381 = vadd.f32 %v380, %v378
    %v382 = vtanh.pop %v381
    %v383 = vmul.f32 %v376, %v382
    %384 = vst [vmem:[#allocation3 + $0x4] sm:$0x3] %v383
    %v385 = vld [vmem:[#allocation2 + $0x6] sm:$0x3]
    %v386 = vpack.c.bf16 %v383, %v383
    %387 = vmatpush.bf16.msra.mxu0 %v240
    %388 = vmatpush.bf16.msra.mxu0 %v239
    %389 = vmatpush.bf16.msra.mxu0 %v238
    %390 = vmatpush.bf16.msra.mxu0 %v237
    %391 = vmatpush.bf16.msra.mxu0 %v236
    %392 = vmatpush.bf16.msra.mxu0 %v235
    %393 = vmatpush.bf16.msra.mxu0 %v234
    %394 = vmatpush.bf16.msra.mxu0 %v233
    %395 = vmatmul.bf16.gmra.mxu0 %v386
    %v396 = vpop.f32.mrf.mxu0
    %v397 = vadd.f32 0.0, %v396
    %v398 = vpop.f32.mrf.mxu0
    %399 = vdwg.mxu0
    %v400 = vadd.f32 %v385, %v397
    %v401 = vxor.u32 %v400, 2147483648
    %v402 = vmul.f32 %v401, 1.442695
    %v403 = vpow.pop %v402
    %v404 = vadd.f32 %v403, 1.0
    %v405 = vrcp.pop %v404
    %v406 = vmul.f32 %v404, %v405
    %v407 = vsub.f32 1.0, %v406
    %v408 = vmul.f32 %v405, %v407
    %v409 = vadd.f32 %v405, %v408
    %vm410 = vweird.f32 %v404
    %vm411 = vweird.f32 %v405
    %vm412 = vmor %vm410, %vm411
    %v413 = vsel %vm412, %v405, %v409
    %v414 = vand.u32 2147483647, %v404
    %vm415 = vcmp.eq.f32.partialorder %v414, 8.507059e+37
    %v416 = vand.u32 %v404, 2147483648
    %v417 = vor.u32 1.1754944e-38, %v416
    %v418 = vsel %vm415, %v417, %v413
    %v419 = vmul.f32 1.0, %v418
    %v420 = vtanh.pop %v400
    %421 = vrot.lane.b32.xlu0 %v419, 32
    %v422 = vpop.permute.xlu0 %421
    %v423 = vmul.f32 %v422, %v420
    %v424 = vmul.f32 %v419, %v381
    %425 = vrot.lane.b32.xlu0 %v423, 64
    %v426 = vpop.permute.xlu0 %425
    %v427 = vadd.f32 %v426, %v424
    %v428 = vtanh.pop %v427
    %v429 = vmul.f32 %v422, %v428
    %430 = vst [vmem:[#allocation3 + $0x6] sm:$0x3] %v429
    %v431 = vld [vmem:[#allocation2 + $0x8] sm:$0x3]
    %v432 = vpack.c.bf16 %v429, %v429
    %433 = vmatpush.bf16.msra.mxu0 %v240
    %434 = vmatpush.bf16.msra.mxu0 %v239
    %435 = vmatpush.bf16.msra.mxu0 %v238
    %436 = vmatpush.bf16.msra.mxu0 %v237
    %437 = vmatpush.bf16.msra.mxu0 %v236
    %438 = vmatpush.bf16.msra.mxu0 %v235
    %439 = vmatpush.bf16.msra.mxu0 %v234
    %440 = vmatpush.bf16.msra.mxu0 %v233
    %441 = vmatmul.bf16.gmra.mxu0 %v432
    %v442 = vpop.f32.mrf.mxu0
    %v443 = vadd.f32 0.0, %v442
    %v444 = vpop.f32.mrf.mxu0
    %445 = vdwg.mxu0
    %v446 = vadd.f32 %v431, %v443
    %v447 = vxor.u32 %v446, 2147483648
    %v448 = vmul.f32 %v447, 1.442695
    %v449 = vpow.pop %v448
    %v450 = vadd.f32 %v449, 1.0
    %v451 = vrcp.pop %v450
    %v452 = vmul.f32 %v450, %v451
    %v453 = vsub.f32 1.0, %v452
    %v454 = vmul.f32 %v451, %v453
    %v455 = vadd.f32 %v451, %v454
    %vm456 = vweird.f32 %v450
    %vm457 = vweird.f32 %v451
    %vm458 = vmor %vm456, %vm457
    %v459 = vsel %vm458, %v451, %v455
    %v460 = vand.u32 2147483647, %v450
    %vm461 = vcmp.eq.f32.partialorder %v460, 8.507059e+37
    %v462 = vand.u32 %v450, 2147483648
    %v463 = vor.u32 1.1754944e-38, %v462
    %v464 = vsel %vm461, %v463, %v459
    %v465 = vmul.f32 1.0, %v464
    %v466 = vtanh.pop %v446
    %467 = vrot.lane.b32.xlu0 %v465, 32
    %v468 = vpop.permute.xlu0 %467
    %v469 = vmul.f32 %v468, %v466
    %v470 = vmul.f32 %v465, %v427
    %471 = vrot.lane.b32.xlu0 %v469, 64
    %v472 = vpop.permute.xlu0 %471
    %v473 = vadd.f32 %v472, %v470
    %v474 = vtanh.pop %v473
    %v475 = vmul.f32 %v468, %v474
    %476 = vst [vmem:[#allocation3 + $0x8] sm:$0x3] %v475
    %v477 = vld [vmem:[#allocation2 + $0xa] sm:$0x3]
    %v478 = vpack.c.bf16 %v475, %v475
    %479 = vmatpush.bf16.msra.mxu0 %v240
    %480 = vmatpush.bf16.msra.mxu0 %v239
    %481 = vmatpush.bf16.msra.mxu0 %v238
    %482 = vmatpush.bf16.msra.mxu0 %v237
    %483 = vmatpush.bf16.msra.mxu0 %v236
    %484 = vmatpush.bf16.msra.mxu0 %v235
    %485 = vmatpush.bf16.msra.mxu0 %v234
    %486 = vmatpush.bf16.msra.mxu0 %v233
    %487 = vmatmul.bf16.gmra.mxu0 %v478
    %v488 = vpop.f32.mrf.mxu0
    %v489 = vadd.f32 0.0, %v488
    %v490 = vpop.f32.mrf.mxu0
    %491 = vdwg.mxu0
    %v492 = vadd.f32 %v477, %v489
    %v493 = vxor.u32 %v492, 2147483648
    %v494 = vmul.f32 %v493, 1.442695
    %v495 = vpow.pop %v494
    %v496 = vadd.f32 %v495, 1.0
    %v497 = vrcp.pop %v496
    %v498 = vmul.f32 %v496, %v497
    %v499 = vsub.f32 1.0, %v498
    %v500 = vmul.f32 %v497, %v499
    %v501 = vadd.f32 %v497, %v500
    %vm502 = vweird.f32 %v496
    %vm503 = vweird.f32 %v497
    %vm504 = vmor %vm502, %vm503
    %v505 = vsel %vm504, %v497, %v501
    %v506 = vand.u32 2147483647, %v496
    %vm507 = vcmp.eq.f32.partialorder %v506, 8.507059e+37
    %v508 = vand.u32 %v496, 2147483648
    %v509 = vor.u32 1.1754944e-38, %v508
    %v510 = vsel %vm507, %v509, %v505
    %v511 = vmul.f32 1.0, %v510
    %v512 = vtanh.pop %v492
    %513 = vrot.lane.b32.xlu0 %v511, 32
    %v514 = vpop.permute.xlu0 %513
    %v515 = vmul.f32 %v514, %v512
    %v516 = vmul.f32 %v511, %v473
    %517 = vrot.lane.b32.xlu0 %v515, 64
    %v518 = vpop.permute.xlu0 %517
    %v519 = vadd.f32 %v518, %v516
    %v520 = vtanh.pop %v519
    %v521 = vmul.f32 %v514, %v520
    %522 = vst [vmem:[#allocation3 + $0xa] sm:$0x3] %v521
    %v523 = vld [vmem:[#allocation2 + $0xc] sm:$0x3]
    %v524 = vpack.c.bf16 %v521, %v521
    %525 = vmatpush.bf16.msra.mxu0 %v240
    %526 = vmatpush.bf16.msra.mxu0 %v239
    %527 = vmatpush.bf16.msra.mxu0 %v238
    %528 = vmatpush.bf16.msra.mxu0 %v237
    %529 = vmatpush.bf16.msra.mxu0 %v236
    %530 = vmatpush.bf16.msra.mxu0 %v235
    %531 = vmatpush.bf16.msra.mxu0 %v234
    %532 = vmatpush.bf16.msra.mxu0 %v233
    %533 = vmatmul.bf16.gmra.mxu0 %v524
    %v534 = vpop.f32.mrf.mxu0
    %v535 = vadd.f32 0.0, %v534
    %v536 = vpop.f32.mrf.mxu0
    %537 = vdwg.mxu0
    %v538 = vadd.f32 %v523, %v535
    %v539 = vxor.u32 %v538, 2147483648
    %v540 = vmul.f32 %v539, 1.442695
    %v541 = vpow.pop %v540
    %v542 = vadd.f32 %v541, 1.0
    %v543 = vrcp.pop %v542
    %v544 = vmul.f32 %v542, %v543
    %v545 = vsub.f32 1.0, %v544
    %v546 = vmul.f32 %v543, %v545
    %v547 = vadd.f32 %v543, %v546
    %vm548 = vweird.f32 %v542
    %vm549 = vweird.f32 %v543
    %vm550 = vmor %vm548, %vm549
    %v551 = vsel %vm550, %v543, %v547
    %v552 = vand.u32 2147483647, %v542
    %vm553 = vcmp.eq.f32.partialorder %v552, 8.507059e+37
    %v554 = vand.u32 %v542, 2147483648
    %v555 = vor.u32 1.1754944e-38, %v554
    %v556 = vsel %vm553, %v555, %v551
    %v557 = vmul.f32 1.0, %v556
    %v558 = vtanh.pop %v538
    %559 = vrot.lane.b32.xlu0 %v557, 32
    %v560 = vpop.permute.xlu0 %559
    %v561 = vmul.f32 %v560, %v558
    %v562 = vmul.f32 %v557, %v519
    %563 = vrot.lane.b32.xlu0 %v561, 64
    %v564 = vpop.permute.xlu0 %563
    %v565 = vadd.f32 %v564, %v562
    %v566 = vtanh.pop %v565
    %v567 = vmul.f32 %v560, %v566
    %568 = vst [vmem:[#allocation3 + $0xc] sm:$0x3] %v567
    %v569 = vld [vmem:[#allocation2 + $0xe] sm:$0x3]
    %v570 = vpack.c.bf16 %v567, %v567
    %571 = vmatpush.bf16.msra.mxu0 %v240
    %572 = vmatpush.bf16.msra.mxu0 %v239
    %573 = vmatpush.bf16.msra.mxu0 %v238
    %574 = vmatpush.bf16.msra.mxu0 %v237
    %575 = vmatpush.bf16.msra.mxu0 %v236
    %576 = vmatpush.bf16.msra.mxu0 %v235
    %577 = vmatpush.bf16.msra.mxu0 %v234
    %578 = vmatpush.bf16.msra.mxu0 %v233
    %579 = vmatmul.bf16.gmra.mxu0 %v570
    %v580 = vpop.f32.mrf.mxu0
    %v581 = vadd.f32 0.0, %v580
    %v582 = vpop.f32.mrf.mxu0
    %583 = vdwg.mxu0
    %v584 = vadd.f32 %v569, %v581
    %v585 = vxor.u32 %v584, 2147483648
    %v586 = vmul.f32 %v585, 1.442695
    %v587 = vpow.pop %v586
    %v588 = vadd.f32 %v587, 1.0
    %v589 = vrcp.pop %v588
    %v590 = vmul.f32 %v588, %v589
    %v591 = vsub.f32 1.0, %v590
    %v592 = vmul.f32 %v589, %v591
    %v593 = vadd.f32 %v589, %v592
    %vm594 = vweird.f32 %v588
    %vm595 = vweird.f32 %v589
    %vm596 = vmor %vm594, %vm595
    %v597 = vsel %vm596, %v589, %v593
    %v598 = vand.u32 2147483647, %v588
    %vm599 = vcmp.eq.f32.partialorder %v598, 8.507059e+37
    %v600 = vand.u32 %v588, 2147483648
    %v601 = vor.u32 1.1754944e-38, %v600
    %v602 = vsel %vm599, %v601, %v597
    %v603 = vmul.f32 1.0, %v602
    %v604 = vtanh.pop %v584
    %605 = vrot.lane.b32.xlu0 %v603, 32
    %v606 = vpop.permute.xlu0 %605
    %v607 = vmul.f32 %v606, %v604
    %v608 = vmul.f32 %v603, %v565
    %609 = vrot.lane.b32.xlu0 %v607, 64
    %v610 = vpop.permute.xlu0 %609
    %v611 = vadd.f32 %v610, %v608
    %v612 = vtanh.pop %v611
    %v613 = vmul.f32 %v606, %v612
    %614 = vst [vmem:[#allocation3 + $0xe] sm:$0x3] %v613
    %v615 = vld [vmem:[#allocation3] sm:$0xff]
    %v616 = vld [vmem:[#allocation3 + $0x8] sm:$0xff]
    %v617 = vpack.c.bf16 %v616, %v615
    %v618 = vld [vmem:[#allocation8] sm:$0xf]
    %v619 = vld [vmem:[#allocation8 + $0x4] sm:$0xf]
    %v620 = vld [vmem:[#allocation8 + $0x8] sm:$0xf]
    %v621 = vld [vmem:[#allocation8 + $0xc] sm:$0xf]
    %v622 = vld [vmem:[#allocation8 + $0x10] sm:$0xf]
    %v623 = vld [vmem:[#allocation8 + $0x14] sm:$0xf]
    %v624 = vld [vmem:[#allocation8 + $0x18] sm:$0xf]
    %v625 = vld [vmem:[#allocation8 + $0x1c] sm:$0xf]
    %v626 = vld [vmem:[#allocation8 + $0x20] sm:$0xf]
    %v627 = vld [vmem:[#allocation8 + $0x24] sm:$0xf]
    %v628 = vld [vmem:[#allocation8 + $0x28] sm:$0xf]
    %v629 = vld [vmem:[#allocation8 + $0x2c] sm:$0xf]
    %v630 = vld [vmem:[#allocation8 + $0x30] sm:$0xf]
    %v631 = vld [vmem:[#allocation8 + $0x34] sm:$0xf]
    %v632 = vld [vmem:[#allocation8 + $0x38] sm:$0xf]
    %v633 = vld [vmem:[#allocation8 + $0x3c] sm:$0xf]
    %v634 = vld [vmem:[#allocation9] sm:$0x1]
    %v636 = vperm.slane %v634, 0
    %v654 = vunpack.c.l.b16 %v618
    %v655 = vunpack.c.l.b16 %v619
    %v656 = vunpack.c.l.b16 %v620
    %v657 = vunpack.c.l.b16 %v621
    %v658 = vunpack.c.l.b16 %v622
    %v659 = vunpack.c.l.b16 %v623
    %v660 = vunpack.c.l.b16 %v624
    %v661 = vunpack.c.l.b16 %v625
    %v662 = vunpack.c.l.b16 %v626
    %v663 = vunpack.c.l.b16 %v627
    %v664 = vunpack.c.l.b16 %v628
    %v665 = vunpack.c.l.b16 %v629
    %v666 = vunpack.c.l.b16 %v630
    %v667 = vunpack.c.l.b16 %v631
    %v668 = vunpack.c.l.b16 %v632
    %v669 = vunpack.c.l.b16 %v633
    %v670 = vpack.c.b16 %v655, %v654
    %v671 = vpack.c.b16 %v657, %v656
    %v672 = vpack.c.b16 %v659, %v658
    %v673 = vpack.c.b16 %v661, %v660
    %v674 = vpack.c.b16 %v663, %v662
    %v675 = vpack.c.b16 %v665, %v664
    %v676 = vpack.c.b16 %v667, %v666
    %v677 = vpack.c.b16 %v669, %v668
    %686 = vmatpush.bf16.msra.mxu0 %v677
    %687 = vmatpush.bf16.msra.mxu0 %v676
    %688 = vmatpush.bf16.msra.mxu0 %v675
    %689 = vmatpush.bf16.msra.mxu0 %v674
    %690 = vmatpush.bf16.msra.mxu0 %v673
    %691 = vmatpush.bf16.msra.mxu0 %v672
    %692 = vmatpush.bf16.msra.mxu0 %v671
    %693 = vmatpush.bf16.msra.mxu0 %v670
    %694 = vmatmul.bf16.gmra.mxu0 %v617
    %v695 = vpop.f32.mrf.mxu0
    %v696 = vadd.f32 %v636, %v695
    %v697 = vpop.f32.mrf.mxu0
    %v698 = vadd.f32 %v636, %v697
    %699 = vdwg.mxu0
    %700 = vst [vmem:[#allocation2] sm:$0xff] %v696
    %701 = vst [vmem:[#allocation2 + $0x8] sm:$0xff] %v698
    %v702 = vld [vmem:[#allocation6] sm:$0xf]
    %v703 = vld [vmem:[#allocation6 + $0x4] sm:$0xf]
    %v704 = vld [vmem:[#allocation6 + $0x8] sm:$0xf]
    %v705 = vld [vmem:[#allocation6 + $0xc] sm:$0xf]
    %v706 = vld [vmem:[#allocation6 + $0x10] sm:$0xf]
    %v707 = vld [vmem:[#allocation6 + $0x14] sm:$0xf]
    %v708 = vld [vmem:[#allocation6 + $0x18] sm:$0xf]
    %v709 = vld [vmem:[#allocation6 + $0x1c] sm:$0xf]
    %v710 = vld [vmem:[#allocation6 + $0x20] sm:$0xf]
    %v711 = vld [vmem:[#allocation6 + $0x24] sm:$0xf]
    %v712 = vld [vmem:[#allocation6 + $0x28] sm:$0xf]
    %v713 = vld [vmem:[#allocation6 + $0x2c] sm:$0xf]
    %v714 = vld [vmem:[#allocation6 + $0x30] sm:$0xf]
    %v715 = vld [vmem:[#allocation6 + $0x34] sm:$0xf]
    %v716 = vld [vmem:[#allocation6 + $0x38] sm:$0xf]
    %v717 = vld [vmem:[#allocation6 + $0x3c] sm:$0xf]
    %v718 = vld [vmem:[#allocation2] sm:$0x3]
    %v735 = vunpack.c.l.b16 %v702
    %v736 = vunpack.c.l.b16 %v703
    %v737 = vunpack.c.l.b16 %v704
    %v738 = vunpack.c.l.b16 %v705
    %v739 = vunpack.c.l.b16 %v706
    %v740 = vunpack.c.l.b16 %v707
    %v741 = vunpack.c.l.b16 %v708
    %v742 = vunpack.c.l.b16 %v709
    %v743 = vunpack.c.l.b16 %v710
    %v744 = vunpack.c.l.b16 %v711
    %v745 = vunpack.c.l.b16 %v712
    %v746 = vunpack.c.l.b16 %v713
    %v747 = vunpack.c.l.b16 %v714
    %v748 = vunpack.c.l.b16 %v715
    %v749 = vunpack.c.l.b16 %v716
    %v750 = vunpack.c.l.b16 %v717
    %v751 = vpack.c.b16 %v736, %v735
    %v752 = vpack.c.b16 %v738, %v737
    %v753 = vpack.c.b16 %v740, %v739
    %v754 = vpack.c.b16 %v742, %v741
    %v755 = vpack.c.b16 %v744, %v743
    %v756 = vpack.c.b16 %v746, %v745
    %v757 = vpack.c.b16 %v748, %v747
    %v758 = vpack.c.b16 %v750, %v749
    %767 = vmatpush.bf16.msra.mxu0 %v758
    %768 = vmatpush.bf16.msra.mxu0 %v757
    %769 = vmatpush.bf16.msra.mxu0 %v756
    %770 = vmatpush.bf16.msra.mxu0 %v755
    %771 = vmatpush.bf16.msra.mxu0 %v754
    %772 = vmatpush.bf16.msra.mxu0 %v753
    %773 = vmatpush.bf16.msra.mxu0 %v752
    %774 = vmatpush.bf16.msra.mxu0 %v751
    %775 = vmatmul.bf16.gmra.mxu0 0
    %v776 = vpop.f32.mrf.mxu0
    %v777 = vadd.f32 0.0, %v776
    %v778 = vpop.f32.mrf.mxu0
    %779 = vdwg.mxu0
    %v780 = vadd.f32 %v718, %v777
    %v781 = vxor.u32 %v780, 2147483648
    %v782 = vmul.f32 %v781, 1.442695
    %v783 = vpow.pop %v782
    %v784 = vadd.f32 %v783, 1.0
    %v785 = vrcp.pop %v784
    %v786 = vmul.f32 %v784, %v785
    %v787 = vsub.f32 1.0, %v786
    %v788 = vmul.f32 %v785, %v787
    %v789 = vadd.f32 %v785, %v788
    %vm790 = vweird.f32 %v784
    %vm791 = vweird.f32 %v785
    %vm792 = vmor %vm790, %vm791
    %v793 = vsel %vm792, %v785, %v789
    %v794 = vand.u32 2147483647, %v784
    %vm795 = vcmp.eq.f32.partialorder %v794, 8.507059e+37
    %v796 = vand.u32 %v784, 2147483648
    %v797 = vor.u32 1.1754944e-38, %v796
    %v798 = vsel %vm795, %v797, %v793
    %v799 = vmul.f32 1.0, %v798
    %v800 = vtanh.pop %v780
    %801 = vrot.lane.b32.xlu0 %v799, 32
    %v802 = vpop.permute.xlu0 %801
    %v803 = vmul.f32 %v802, %v800
    %v804 = vmul.f32 %v799, 0.0
    %805 = vrot.lane.b32.xlu0 %v803, 64
    %v806 = vpop.permute.xlu0 %805
    %v807 = vadd.f32 %v806, %v804
    %v808 = vtanh.pop %v807
    %v809 = vmul.f32 %v802, %v808
    %810 = vst [vmem:[#allocation3] sm:$0x3] %v809
    %v811 = vld [vmem:[#allocation2 + $0x2] sm:$0x3]
    %v812 = vpack.c.bf16 %v809, %v809
    %813 = vmatpush.bf16.msra.mxu0 %v758
    %814 = vmatpush.bf16.msra.mxu0 %v757
    %815 = vmatpush.bf16.msra.mxu0 %v756
    %816 = vmatpush.bf16.msra.mxu0 %v755
    %817 = vmatpush.bf16.msra.mxu0 %v754
    %818 = vmatpush.bf16.msra.mxu0 %v753
    %819 = vmatpush.bf16.msra.mxu0 %v752
    %820 = vmatpush.bf16.msra.mxu0 %v751
    %821 = vmatmul.bf16.gmra.mxu0 %v812
    %v822 = vpop.f32.mrf.mxu0
    %v823 = vadd.f32 0.0, %v822
    %v824 = vpop.f32.mrf.mxu0
    %825 = vdwg.mxu0
    %v826 = vadd.f32 %v811, %v823
    %v827 = vxor.u32 %v826, 2147483648
    %v828 = vmul.f32 %v827, 1.442695
    %v829 = vpow.pop %v828
    %v830 = vadd.f32 %v829, 1.0
    %v831 = vrcp.pop %v830
    %v832 = vmul.f32 %v830, %v831
    %v833 = vsub.f32 1.0, %v832
    %v834 = vmul.f32 %v831, %v833
    %v835 = vadd.f32 %v831, %v834
    %vm836 = vweird.f32 %v830
    %vm837 = vweird.f32 %v831
    %vm838 = vmor %vm836, %vm837
    %v839 = vsel %vm838, %v831, %v835
    %v840 = vand.u32 2147483647, %v830
    %vm841 = vcmp.eq.f32.partialorder %v840, 8.507059e+37
    %v842 = vand.u32 %v830, 2147483648
    %v843 = vor.u32 1.1754944e-38, %v842
    %v844 = vsel %vm841, %v843, %v839
    %v845 = vmul.f32 1.0, %v844
    %v846 = vtanh.pop %v826
    %847 = vrot.lane.b32.xlu0 %v845, 32
    %v848 = vpop.permute.xlu0 %847
    %v849 = vmul.f32 %v848, %v846
    %v850 = vmul.f32 %v845, %v807
    %851 = vrot.lane.b32.xlu0 %v849, 64
    %v852 = vpop.permute.xlu0 %851
    %v853 = vadd.f32 %v852, %v850
    %v854 = vtanh.pop %v853
    %v855 = vmul.f32 %v848, %v854
    %856 = vst [vmem:[#allocation3 + $0x2] sm:$0x3] %v855
    %v857 = vld [vmem:[#allocation2 + $0x4] sm:$0x3]
    %v858 = vpack.c.bf16 %v855, %v855
    %859 = vmatpush.bf16.msra.mxu0 %v758
    %860 = vmatpush.bf16.msra.mxu0 %v757
    %861 = vmatpush.bf16.msra.mxu0 %v756
    %862 = vmatpush.bf16.msra.mxu0 %v755
    %863 = vmatpush.bf16.msra.mxu0 %v754
    %864 = vmatpush.bf16.msra.mxu0 %v753
    %865 = vmatpush.bf16.msra.mxu0 %v752
    %866 = vmatpush.bf16.msra.mxu0 %v751
    %867 = vmatmul.bf16.gmra.mxu0 %v858
    %v868 = vpop.f32.mrf.mxu0
    %v869 = vadd.f32 0.0, %v868
    %v870 = vpop.f32.mrf.mxu0
    %871 = vdwg.mxu0
    %v872 = vadd.f32 %v857, %v869
    %v873 = vxor.u32 %v872, 2147483648
    %v874 = vmul.f32 %v873, 1.442695
    %v875 = vpow.pop %v874
    %v876 = vadd.f32 %v875, 1.0
    %v877 = vrcp.pop %v876
    %v878 = vmul.f32 %v876, %v877
    %v879 = vsub.f32 1.0, %v878
    %v880 = vmul.f32 %v877, %v879
    %v881 = vadd.f32 %v877, %v880
    %vm882 = vweird.f32 %v876
    %vm883 = vweird.f32 %v877
    %vm884 = vmor %vm882, %vm883
    %v885 = vsel %vm884, %v877, %v881
    %v886 = vand.u32 2147483647, %v876
    %vm887 = vcmp.eq.f32.partialorder %v886, 8.507059e+37
    %v888 = vand.u32 %v876, 2147483648
    %v889 = vor.u32 1.1754944e-38, %v888
    %v890 = vsel %vm887, %v889, %v885
    %v891 = vmul.f32 1.0, %v890
    %v892 = vtanh.pop %v872
    %893 = vrot.lane.b32.xlu0 %v891, 32
    %v894 = vpop.permute.xlu0 %893
    %v895 = vmul.f32 %v894, %v892
    %v896 = vmul.f32 %v891, %v853
    %897 = vrot.lane.b32.xlu0 %v895, 64
    %v898 = vpop.permute.xlu0 %897
    %v899 = vadd.f32 %v898, %v896
    %v900 = vtanh.pop %v899
    %v901 = vmul.f32 %v894, %v900
    %902 = vst [vmem:[#allocation3 + $0x4] sm:$0x3] %v901
    %v903 = vld [vmem:[#allocation2 + $0x6] sm:$0x3]
    %v904 = vpack.c.bf16 %v901, %v901
    %905 = vmatpush.bf16.msra.mxu0 %v758
    %906 = vmatpush.bf16.msra.mxu0 %v757
    %907 = vmatpush.bf16.msra.mxu0 %v756
    %908 = vmatpush.bf16.msra.mxu0 %v755
    %909 = vmatpush.bf16.msra.mxu0 %v754
    %910 = vmatpush.bf16.msra.mxu0 %v753
    %911 = vmatpush.bf16.msra.mxu0 %v752
    %912 = vmatpush.bf16.msra.mxu0 %v751
    %913 = vmatmul.bf16.gmra.mxu0 %v904
    %v914 = vpop.f32.mrf.mxu0
    %v915 = vadd.f32 0.0, %v914
    %v916 = vpop.f32.mrf.mxu0
    %917 = vdwg.mxu0
    %v918 = vadd.f32 %v903, %v915
    %v919 = vxor.u32 %v918, 2147483648
    %v920 = vmul.f32 %v919, 1.442695
    %v921 = vpow.pop %v920
    %v922 = vadd.f32 %v921, 1.0
    %v923 = vrcp.pop %v922
    %v924 = vmul.f32 %v922, %v923
    %v925 = vsub.f32 1.0, %v924
    %v926 = vmul.f32 %v923, %v925
    %v927 = vadd.f32 %v923, %v926
    %vm928 = vweird.f32 %v922
    %vm929 = vweird.f32 %v923
    %vm930 = vmor %vm928, %vm929
    %v931 = vsel %vm930, %v923, %v927
    %v932 = vand.u32 2147483647, %v922
    %vm933 = vcmp.eq.f32.partialorder %v932, 8.507059e+37
    %v934 = vand.u32 %v922, 2147483648
    %v935 = vor.u32 1.1754944e-38, %v934
    %v936 = vsel %vm933, %v935, %v931
    %v937 = vmul.f32 1.0, %v936
    %v938 = vtanh.pop %v918
    %939 = vrot.lane.b32.xlu0 %v937, 32
    %v940 = vpop.permute.xlu0 %939
    %v941 = vmul.f32 %v940, %v938
    %v942 = vmul.f32 %v937, %v899
    %943 = vrot.lane.b32.xlu0 %v941, 64
    %v944 = vpop.permute.xlu0 %943
    %v945 = vadd.f32 %v944, %v942
    %v946 = vtanh.pop %v945
    %v947 = vmul.f32 %v940, %v946
    %948 = vst [vmem:[#allocation3 + $0x6] sm:$0x3] %v947
    %v949 = vld [vmem:[#allocation2 + $0x8] sm:$0x3]
    %v950 = vpack.c.bf16 %v947, %v947
    %951 = vmatpush.bf16.msra.mxu0 %v758
    %952 = vmatpush.bf16.msra.mxu0 %v757
    %953 = vmatpush.bf16.msra.mxu0 %v756
    %954 = vmatpush.bf16.msra.mxu0 %v755
    %955 = vmatpush.bf16.msra.mxu0 %v754
    %956 = vmatpush.bf16.msra.mxu0 %v753
    %957 = vmatpush.bf16.msra.mxu0 %v752
    %958 = vmatpush.bf16.msra.mxu0 %v751
    %959 = vmatmul.bf16.gmra.mxu0 %v950
    %v960 = vpop.f32.mrf.mxu0
    %v961 = vadd.f32 0.0, %v960
    %v962 = vpop.f32.mrf.mxu0
    %963 = vdwg.mxu0
    %v964 = vadd.f32 %v949, %v961
    %v965 = vxor.u32 %v964, 2147483648
    %v966 = vmul.f32 %v965, 1.442695
    %v967 = vpow.pop %v966
    %v968 = vadd.f32 %v967, 1.0
    %v969 = vrcp.pop %v968
    %v970 = vmul.f32 %v968, %v969
    %v971 = vsub.f32 1.0, %v970
    %v972 = vmul.f32 %v969, %v971
    %v973 = vadd.f32 %v969, %v972
    %vm974 = vweird.f32 %v968
    %vm975 = vweird.f32 %v969
    %vm976 = vmor %vm974, %vm975
    %v977 = vsel %vm976, %v969, %v973
    %v978 = vand.u32 2147483647, %v968
    %vm979 = vcmp.eq.f32.partialorder %v978, 8.507059e+37
    %v980 = vand.u32 %v968, 2147483648
    %v981 = vor.u32 1.1754944e-38, %v980
    %v982 = vsel %vm979, %v981, %v977
    %v983 = vmul.f32 1.0, %v982
    %v984 = vtanh.pop %v964
    %985 = vrot.lane.b32.xlu0 %v983, 32
    %v986 = vpop.permute.xlu0 %985
    %v987 = vmul.f32 %v986, %v984
    %v988 = vmul.f32 %v983, %v945
    %989 = vrot.lane.b32.xlu0 %v987, 64
    %v990 = vpop.permute.xlu0 %989
    %v991 = vadd.f32 %v990, %v988
    %v992 = vtanh.pop %v991
    %v993 = vmul.f32 %v986, %v992
    %994 = vst [vmem:[#allocation3 + $0x8] sm:$0x3] %v993
    %v995 = vld [vmem:[#allocation2 + $0xa] sm:$0x3]
    %v996 = vpack.c.bf16 %v993, %v993
    %997 = vmatpush.bf16.msra.mxu0 %v758
    %998 = vmatpush.bf16.msra.mxu0 %v757
    %999 = vmatpush.bf16.msra.mxu0 %v756
    %1000 = vmatpush.bf16.msra.mxu0 %v755
    %1001 = vmatpush.bf16.msra.mxu0 %v754
    %1002 = vmatpush.bf16.msra.mxu0 %v753
    %1003 = vmatpush.bf16.msra.mxu0 %v752
    %1004 = vmatpush.bf16.msra.mxu0 %v751
    %1005 = vmatmul.bf16.gmra.mxu0 %v996
    %v1006 = vpop.f32.mrf.mxu0
    %v1007 = vadd.f32 0.0, %v1006
    %v1008 = vpop.f32.mrf.mxu0
    %1009 = vdwg.mxu0
    %v1010 = vadd.f32 %v995, %v1007
    %v1011 = vxor.u32 %v1010, 2147483648
    %v1012 = vmul.f32 %v1011, 1.442695
    %v1013 = vpow.pop %v1012
    %v1014 = vadd.f32 %v1013, 1.0
    %v1015 = vrcp.pop %v1014
    %v1016 = vmul.f32 %v1014, %v1015
    %v1017 = vsub.f32 1.0, %v1016
    %v1018 = vmul.f32 %v1015, %v1017
    %v1019 = vadd.f32 %v1015, %v1018
    %vm1020 = vweird.f32 %v1014
    %vm1021 = vweird.f32 %v1015
    %vm1022 = vmor %vm1020, %vm1021
    %v1023 = vsel %vm1022, %v1015, %v1019
    %v1024 = vand.u32 2147483647, %v1014
    %vm1025 = vcmp.eq.f32.partialorder %v1024, 8.507059e+37
    %v1026 = vand.u32 %v1014, 2147483648
    %v1027 = vor.u32 1.1754944e-38, %v1026
    %v1028 = vsel %vm1025, %v1027, %v1023
    %v1029 = vmul.f32 1.0, %v1028
    %v1030 = vtanh.pop %v1010
    %1031 = vrot.lane.b32.xlu0 %v1029, 32
    %v1032 = vpop.permute.xlu0 %1031
    %v1033 = vmul.f32 %v1032, %v1030
    %v1034 = vmul.f32 %v1029, %v991
    %1035 = vrot.lane.b32.xlu0 %v1033, 64
    %v1036 = vpop.permute.xlu0 %1035
    %v1037 = vadd.f32 %v1036, %v1034
    %v1038 = vtanh.pop %v1037
    %v1039 = vmul.f32 %v1032, %v1038
    %1040 = vst [vmem:[#allocation3 + $0xa] sm:$0x3] %v1039
    %v1041 = vld [vmem:[#allocation2 + $0xc] sm:$0x3]
    %v1042 = vpack.c.bf16 %v1039, %v1039
    %1043 = vmatpush.bf16.msra.mxu0 %v758
    %1044 = vmatpush.bf16.msra.mxu0 %v757
    %1045 = vmatpush.bf16.msra.mxu0 %v756
    %1046 = vmatpush.bf16.msra.mxu0 %v755
    %1047 = vmatpush.bf16.msra.mxu0 %v754
    %1048 = vmatpush.bf16.msra.mxu0 %v753
    %1049 = vmatpush.bf16.msra.mxu0 %v752
    %1050 = vmatpush.bf16.msra.mxu0 %v751
    %1051 = vmatmul.bf16.gmra.mxu0 %v1042
    %v1052 = vpop.f32.mrf.mxu0
    %v1053 = vadd.f32 0.0, %v1052
    %v1054 = vpop.f32.mrf.mxu0
    %1055 = vdwg.mxu0
    %v1056 = vadd.f32 %v1041, %v1053
    %v1057 = vxor.u32 %v1056, 2147483648
    %v1058 = vmul.f32 %v1057, 1.442695
    %v1059 = vpow.pop %v1058
    %v1060 = vadd.f32 %v1059, 1.0
    %v1061 = vrcp.pop %v1060
    %v1062 = vmul.f32 %v1060, %v1061
    %v1063 = vsub.f32 1.0, %v1062
    %v1064 = vmul.f32 %v1061, %v1063
    %v1065 = vadd.f32 %v1061, %v1064
    %vm1066 = vweird.f32 %v1060
    %vm1067 = vweird.f32 %v1061
    %vm1068 = vmor %vm1066, %vm1067
    %v1069 = vsel %vm1068, %v1061, %v1065
    %v1070 = vand.u32 2147483647, %v1060
    %vm1071 = vcmp.eq.f32.partialorder %v1070, 8.507059e+37
    %v1072 = vand.u32 %v1060, 2147483648
    %v1073 = vor.u32 1.1754944e-38, %v1072
    %v1074 = vsel %vm1071, %v1073, %v1069
    %v1075 = vmul.f32 1.0, %v1074
    %v1076 = vtanh.pop %v1056
    %1077 = vrot.lane.b32.xlu0 %v1075, 32
    %v1078 = vpop.permute.xlu0 %1077
    %v1079 = vmul.f32 %v1078, %v1076
    %v1080 = vmul.f32 %v1075, %v1037
    %1081 = vrot.lane.b32.xlu0 %v1079, 64
    %v1082 = vpop.permute.xlu0 %1081
    %v1083 = vadd.f32 %v1082, %v1080
    %v1084 = vtanh.pop %v1083
    %v1085 = vmul.f32 %v1078, %v1084
    %1086 = vst [vmem:[#allocation3 + $0xc] sm:$0x3] %v1085
    %v1087 = vld [vmem:[#allocation2 + $0xe] sm:$0x3]
    %v1088 = vpack.c.bf16 %v1085, %v1085
    %1089 = vmatpush.bf16.msra.mxu0 %v758
    %1090 = vmatpush.bf16.msra.mxu0 %v757
    %1091 = vmatpush.bf16.msra.mxu0 %v756
    %1092 = vmatpush.bf16.msra.mxu0 %v755
    %1093 = vmatpush.bf16.msra.mxu0 %v754
    %1094 = vmatpush.bf16.msra.mxu0 %v753
    %1095 = vmatpush.bf16.msra.mxu0 %v752
    %1096 = vmatpush.bf16.msra.mxu0 %v751
    %1097 = vmatmul.bf16.gmra.mxu0 %v1088
    %v1098 = vpop.f32.mrf.mxu0
    %v1099 = vadd.f32 0.0, %v1098
    %v1100 = vpop.f32.mrf.mxu0
    %1101 = vdwg.mxu0
    %v1102 = vadd.f32 %v1087, %v1099
    %v1103 = vxor.u32 %v1102, 2147483648
    %v1104 = vmul.f32 %v1103, 1.442695
    %v1105 = vpow.pop %v1104
    %v1106 = vadd.f32 %v1105, 1.0
    %v1107 = vrcp.pop %v1106
    %v1108 = vmul.f32 %v1106, %v1107
    %v1109 = vsub.f32 1.0, %v1108
    %v1110 = vmul.f32 %v1107, %v1109
    %v1111 = vadd.f32 %v1107, %v1110
    %vm1112 = vweird.f32 %v1106
    %vm1113 = vweird.f32 %v1107
    %vm1114 = vmor %vm1112, %vm1113
    %v1115 = vsel %vm1114, %v1107, %v1111
    %v1116 = vand.u32 2147483647, %v1106
    %vm1117 = vcmp.eq.f32.partialorder %v1116, 8.507059e+37
    %v1118 = vand.u32 %v1106, 2147483648
    %v1119 = vor.u32 1.1754944e-38, %v1118
    %v1120 = vsel %vm1117, %v1119, %v1115
    %v1121 = vmul.f32 1.0, %v1120
    %v1122 = vtanh.pop %v1102
    %1123 = vrot.lane.b32.xlu0 %v1121, 32
    %v1124 = vpop.permute.xlu0 %1123
    %v1125 = vmul.f32 %v1124, %v1122
    %v1126 = vmul.f32 %v1121, %v1083
    %1127 = vrot.lane.b32.xlu0 %v1125, 64
    %v1128 = vpop.permute.xlu0 %1127
    %v1129 = vadd.f32 %v1128, %v1126
    %v1130 = vtanh.pop %v1129
    %v1131 = vmul.f32 %v1124, %v1130
    %1132 = vst [vmem:[#allocation3 + $0xe] sm:$0x3] %v1131
    %v1133 = vld [vmem:[#allocation3] sm:$0xff]
    %v1134 = vld [vmem:[#allocation3 + $0x8] sm:$0xff]
    %v1135 = vpack.c.bf16 %v1134, %v1133
    %v1136 = vld [vmem:[%s7] sm:$0xf]
    %v1137 = vld [vmem:[%s7 + $0x4] sm:$0xf]
    %v1138 = vld [vmem:[%s7 + $0x8] sm:$0xf]
    %v1139 = vld [vmem:[%s7 + $0xc] sm:$0xf]
    %v1140 = vld [vmem:[%s7 + $0x10] sm:$0xf]
    %v1141 = vld [vmem:[%s7 + $0x14] sm:$0xf]
    %v1142 = vld [vmem:[%s7 + $0x18] sm:$0xf]
    %v1143 = vld [vmem:[%s7 + $0x1c] sm:$0xf]
    %v1144 = vld [vmem:[%s7 + $0x20] sm:$0xf]
    %v1145 = vld [vmem:[%s7 + $0x24] sm:$0xf]
    %v1146 = vld [vmem:[%s7 + $0x28] sm:$0xf]
    %v1147 = vld [vmem:[%s7 + $0x2c] sm:$0xf]
    %v1148 = vld [vmem:[%s7 + $0x30] sm:$0xf]
    %v1149 = vld [vmem:[%s7 + $0x34] sm:$0xf]
    %v1150 = vld [vmem:[%s7 + $0x38] sm:$0xf]
    %v1151 = vld [vmem:[%s7 + $0x3c] sm:$0xf]
    %v1152 = vld [vmem:[%s8] sm:$0x1]
    %v1154 = vperm.slane %v1152, 0
    %v1172 = vunpack.c.l.b16 %v1136
    %v1173 = vunpack.c.l.b16 %v1137
    %v1174 = vunpack.c.l.b16 %v1138
    %v1175 = vunpack.c.l.b16 %v1139
    %v1176 = vunpack.c.l.b16 %v1140
    %v1177 = vunpack.c.l.b16 %v1141
    %v1178 = vunpack.c.l.b16 %v1142
    %v1179 = vunpack.c.l.b16 %v1143
    %v1180 = vunpack.c.l.b16 %v1144
    %v1181 = vunpack.c.l.b16 %v1145
    %v1182 = vunpack.c.l.b16 %v1146
    %v1183 = vunpack.c.l.b16 %v1147
    %v1184 = vunpack.c.l.b16 %v1148
    %v1185 = vunpack.c.l.b16 %v1149
    %v1186 = vunpack.c.l.b16 %v1150
    %v1187 = vunpack.c.l.b16 %v1151
    %v1188 = vpack.c.b16 %v1173, %v1172
    %v1189 = vpack.c.b16 %v1175, %v1174
    %v1190 = vpack.c.b16 %v1177, %v1176
    %v1191 = vpack.c.b16 %v1179, %v1178
    %v1192 = vpack.c.b16 %v1181, %v1180
    %v1193 = vpack.c.b16 %v1183, %v1182
    %v1194 = vpack.c.b16 %v1185, %v1184
    %v1195 = vpack.c.b16 %v1187, %v1186
    %1204 = vmatpush.bf16.msra.mxu0 %v1195
    %1205 = vmatpush.bf16.msra.mxu0 %v1194
    %1206 = vmatpush.bf16.msra.mxu0 %v1193
    %1207 = vmatpush.bf16.msra.mxu0 %v1192
    %1208 = vmatpush.bf16.msra.mxu0 %v1191
    %1209 = vmatpush.bf16.msra.mxu0 %v1190
    %1210 = vmatpush.bf16.msra.mxu0 %v1189
    %1211 = vmatpush.bf16.msra.mxu0 %v1188
    %1212 = vmatmul.bf16.gmra.mxu0 %v1135
    %v1213 = vpop.f32.mrf.mxu0
    %v1214 = vadd.f32 %v1154, %v1213
    %v1215 = vpop.f32.mrf.mxu0
    %v1216 = vadd.f32 %v1154, %v1215
    %1217 = vdwg.mxu0
    %v1218 = vxor.u32 %v1214, 2147483648
    %v1219 = vxor.u32 %v1216, 2147483648
    %v1220 = vmul.f32 %v1218, 1.442695
    %v1221 = vpow.pop %v1220
    %v1222 = vmul.f32 %v1219, 1.442695
    %v1223 = vpow.pop %v1222
    %v1224 = vadd.f32 %v1221, 1.0
    %v1225 = vadd.f32 %v1223, 1.0
    %v1226 = vrcp.pop %v1224
    %v1227 = vmul.f32 %v1224, %v1226
    %v1228 = vsub.f32 1.0, %v1227
    %v1229 = vmul.f32 %v1226, %v1228
    %v1230 = vadd.f32 %v1226, %v1229
    %vm1231 = vweird.f32 %v1224
    %vm1232 = vweird.f32 %v1226
    %vm1233 = vmor %vm1231, %vm1232
    %v1234 = vsel %vm1233, %v1226, %v1230
    %v1235 = vand.u32 2147483647, %v1224
    %vm1236 = vcmp.eq.f32.partialorder %v1235, 8.507059e+37
    %v1237 = vand.u32 %v1224, 2147483648
    %v1238 = vor.u32 1.1754944e-38, %v1237
    %v1239 = vsel %vm1236, %v1238, %v1234
    %v1240 = vmul.f32 1.0, %v1239
    %v1241 = vrcp.pop %v1225
    %v1242 = vmul.f32 %v1225, %v1241
    %v1243 = vsub.f32 1.0, %v1242
    %v1244 = vmul.f32 %v1241, %v1243
    %v1245 = vadd.f32 %v1241, %v1244
    %vm1246 = vweird.f32 %v1225
    %vm1247 = vweird.f32 %v1241
    %vm1248 = vmor %vm1246, %vm1247
    %v1249 = vsel %vm1248, %v1241, %v1245
    %v1250 = vand.u32 2147483647, %v1225
    %vm1251 = vcmp.eq.f32.partialorder %v1250, 8.507059e+37
    %v1252 = vand.u32 %v1225, 2147483648
    %v1253 = vor.u32 1.1754944e-38, %v1252
    %v1254 = vsel %vm1251, %v1253, %v1249
    %v1255 = vmul.f32 1.0, %v1254
    %vm1256 = vcmask 48128
    %1257 = vst.msk [vmem:[%s9] sm:$0xff] %vm1256, %v1240
    %1258 = vst.msk [vmem:[%s9 + $0x8] sm:$0xff] %vm1256, %v1255
    // Predicated region
    $region54: #{causal_temporal_lstm_forward.1} parent=1 // pred_check
      _
    $region55: #{causal_temporal_lstm_forward.1} parent=1 // pred_check_branch
      %1260 = sbr.rel (0) target = $region57
    $region56: #{causal_temporal_lstm_forward.1} parent=1 // pred_region
      _
    $region57: #{causal_temporal_lstm_forward.1} parent=1 // pred_fallthru
      _
    // Predicated region
    $region58: #{causal_temporal_lstm_forward.1} parent=1 // pred_check
      _
    $region59: #{causal_temporal_lstm_forward.1} parent=1 // pred_check_branch
      %1262 = sbr.rel (0) target = $region61
    $region60: #{causal_temporal_lstm_forward.1} parent=1 // pred_region
      _
    $region61: #{causal_temporal_lstm_forward.1} parent=1 // pred_fallthru
      _
    %1263 = vsyncpa [#allocation5], 1
    %1264 = vsyncpa [#allocation7], 1
    %1265 = vsyncpa [#allocation10], 1

</llo_original>
